<compile_context>
chip_gen: v7x
topology: tpu7x:2x2x1
jax: 0.10.0
libtpu: 0.0.40
codegen_flags: <defaults>
</compile_context>

<pallas_src>
import math
import functools

import jax
import jax.numpy as jnp
import numpy as np
from jax.experimental import pallas as pl
from jax.experimental.pallas import tpu as pltpu


# ----------------------------- Pallas kernel --------------------------------

def _attn_residual_kernel(x_ref, g_ref, beta_ref, wqkv_ref, bqkv_ref,
                          wproj_ref, bproj_ref, o_ref,
                          q_s, k_s, v_s, *, n_head, tq):
    """out[b, q_tile] = x[b, q_tile] + c_proj(SDPA(heads(c_attn(LN(x[b])))))."""
    T = x_ref.shape[1]
    C = x_ref.shape[2]
    hs = C // n_head
    qi = pl.program_id(1)

    # --- once per batch element: LayerNorm + qkv projection over full T, ----
    # --- head-split into (n_head, T, hs) scratches (q pre-scaled already). --
    @pl.when(qi == 0)
    def _():
        x = x_ref[0]                                        # (T, C) f32
        mu = jnp.mean(x, axis=-1, keepdims=True)
        xc = x - mu
        var = jnp.mean(xc * xc, axis=-1, keepdims=True)
        ln = (xc * jax.lax.rsqrt(var + 1e-5)) * g_ref[...] + beta_ref[...]
        qkv = jnp.dot(ln.astype(jnp.bfloat16), wqkv_ref[...],
                      preferred_element_type=jnp.float32) + bqkv_ref[...]
        for h in range(n_head):                             # static, fill-once
            q_s[h] = qkv[:, h * hs:(h + 1) * hs]
            k_s[h] = qkv[:, C + h * hs:C + (h + 1) * hs].astype(jnp.bfloat16)
            v_s[h] = qkv[:, 2 * C + h * hs:2 * C + (h + 1) * hs].astype(jnp.bfloat16)

    # --- per query tile: batched-head attention + projection + residual. ----
    q0 = pl.multiple_of(qi * tq, tq)
    qh = q_s[:, pl.ds(q0, tq), :].astype(jnp.bfloat16)      # (n_head, tq, hs)
    s = jnp.einsum("hqd,hkd->hqk", qh, k_s[...],
                   preferred_element_type=jnp.float32)      # (n_head, tq, T)
    s = s - jnp.max(s, axis=-1, keepdims=True)
    e = jnp.exp(s)
    p = e * pl.reciprocal(jnp.sum(e, axis=-1, keepdims=True), approx=True)
    y = jnp.einsum("hqk,hkd->hqd", p.astype(jnp.bfloat16), v_s[...],
                   preferred_element_type=jnp.float32)      # (n_head, tq, hs)
    yb = y.astype(jnp.bfloat16)

    acc = jnp.zeros((tq, C), jnp.float32)
    for h in range(n_head):                                 # head merge == y @ Wproj
        acc = acc + jnp.dot(yb[h], wproj_ref[h],
                            preferred_element_type=jnp.float32)

    x_tile = x_ref[0, pl.ds(q0, tq), :]
    o_ref[0] = (x_tile + acc + bproj_ref[...]).astype(o_ref.dtype)


# ------------------------------- wrapper -------------------------------------

def _pick_q_block(T, q_block=None):
    if q_block is not None:
        assert T % q_block == 0
        return q_block
    for cand in (256, 128, 64, 32, 16, 8):
        if T % cand == 0:
            return cand
    return T


def _build_step(B, T, C, n_head, tq, out_dtype):
    hs = C // n_head
    n_qt = T // tq
    kernel = functools.partial(_attn_residual_kernel, n_head=n_head, tq=tq)

    def full(shape):
        return pl.BlockSpec(shape, lambda b, qi, _s=shape: (0,) * len(_s))

    bf16, f32 = 2, 4
    vmem_est = (
        2 * T * C * f32                                     # x block (double-buffered)
        + 2 * tq * C * f32                                  # out block
        + 2 * (C * 3 * C * bf16 + 3 * C * f32               # wqkv + bqkv
               + C * C * bf16 + 5 * C * f32)                # wproj + biases/ln params
        + n_head * T * hs * (f32 + 2 * bf16)                # q(f32) + k,v(bf16) scratch
        + T * 4 * C * f32                                   # ln + qkv intermediates
        + n_head * tq * T * (2 * f32 + bf16)                # scores, exp, p(bf16)
        + 4 * tq * C * f32                                  # y / acc / out temps
    )
    vmem_limit = int(min(64 * 2 ** 20, max(32 * 2 ** 20, 1.3 * vmem_est)))

    return pl.pallas_call(
        kernel,
        out_shape=jax.ShapeDtypeStruct((B, T, C), out_dtype),
        grid_spec=pltpu.PrefetchScalarGridSpec(
            num_scalar_prefetch=0,
            grid=(B, n_qt),
            in_specs=[
                pl.BlockSpec((1, T, C), lambda b, qi: (b, 0, 0)),  # x (full seq)
                full((1, C)),                # ln gamma
                full((1, C)),                # ln beta
                full((C, 3 * C)),            # c_attn W  (bf16, q pre-scaled)
                full((1, 3 * C)),            # c_attn b  (f32,  q pre-scaled)
                full((n_head, hs, C)),       # c_proj W per head (bf16)
                full((1, C)),                # c_proj b  (f32)
            ],
            out_specs=pl.BlockSpec((1, tq, C), lambda b, qi: (b, qi, 0)),
            scratch_shapes=[
                pltpu.VMEM((n_head, T, hs), jnp.float32),    # q (pre-scaled)
                pltpu.VMEM((n_head, T, hs), jnp.bfloat16),   # k
                pltpu.VMEM((n_head, T, hs), jnp.bfloat16),   # v
            ],
        ),
        compiler_params=pltpu.CompilerParams(
            dimension_semantics=("parallel", "arbitrary"),
            vmem_limit_bytes=vmem_limit,
        ),
    )


def block_forward(x, params, n_head, q_block=None):
    """x: (B, T, C) float32.  params: dict of fp32 weights (see __main__)."""
    B, T, C = x.shape
    assert C % n_head == 0
    hs = C // n_head
    tq = _pick_q_block(T, q_block)
    inv_sqrt_hs = 1.0 / math.sqrt(hs)

    # Fold the softmax scale into the q-columns of c_attn at trace time; cast
    # matmul weights to bf16; pre-split c_proj rows per head.
    wqkv = params["wqkv"]
    bqkv = params["bqkv"]
    wqkv_s = jnp.concatenate([wqkv[:, :C] * inv_sqrt_hs, wqkv[:, C:]],
                             axis=1).astype(jnp.bfloat16)
    bqkv_s = jnp.concatenate([bqkv[:, :C] * inv_sqrt_hs, bqkv[:, C:]],
                             axis=1).astype(jnp.float32)
    wproj_h = params["wproj"].reshape(n_head, hs, C).astype(jnp.bfloat16)
    bproj = params["bproj"].astype(jnp.float32)

    step = _build_step(B, T, C, n_head, tq, x.dtype)
    # x = x + attn(ln_1(x));  x = x + attn(ln_2(x))  (same attention weights)
    h = step(x, params["g1"], params["b1"], wqkv_s, bqkv_s, wproj_h, bproj)
    h = step(h, params["g2"], params["b2"], wqkv_s, bqkv_s, wproj_h, bproj)
    return h


# --------------------------- pure-JAX reference ------------------------------

def _ref_block(x, p, n_head):
    def ln(h, g, b):
        mu = h.mean(-1, keepdims=True)
        var = ((h - mu) ** 2).mean(-1, keepdims=True)
        return (h - mu) / jnp.sqrt(var + 1e-5) * g + b

    def attn(h):
        B, T, C = h.shape
        hs = C // n_head
        qkv = h @ p["wqkv"] + p["bqkv"][0]
        q, k, v = jnp.split(qkv, 3, axis=-1)
        q = q.reshape(B, T, n_head, hs).transpose(0, 2, 1, 3)
        k = k.reshape(B, T, n_head, hs).transpose(0, 2, 1, 3)
        v = v.reshape(B, T, n_head, hs).transpose(0, 2, 1, 3)
        s = jnp.einsum("bhqd,bhkd->bhqk", q, k) / math.sqrt(hs)
        a = jax.nn.softmax(s, axis=-1)
        y = jnp.einsum("bhqk,bhkd->bhqd", a, v)
        y = y.transpose(0, 2, 1, 3).reshape(B, T, C)
        return y @ p["wproj"] + p["bproj"][0]

    x = x + attn(ln(x, p["g1"][0], p["b1"][0]))
    x = x + attn(ln(x, p["g2"][0], p["b2"][0]))
    return x


# --------------------------------- main --------------------------------------

if __name__ == "__main__":
    # Small config consistent with the module (n_embd divisible by n_head).
    # T=16 with q_block=8 exercises the query-tiled grid (2 tiles per batch
    # element) and the per-batch K/V scratch reuse.
    B, T, C, n_head = 2, 16, 32, 4

    key = jax.random.PRNGKey(0)
    ks = jax.random.split(key, 9)
    scale = 0.02
    params = {
        "g1":    1.0 + scale * jax.random.normal(ks[0], (1, C), jnp.float32),
        "b1":    scale * jax.random.normal(ks[1], (1, C), jnp.float32),
        "wqkv":  scale * jax.random.normal(ks[2], (C, 3 * C), jnp.float32),
        "bqkv":  scale * jax.random.normal(ks[3], (1, 3 * C), jnp.float32),
        "wproj": scale * jax.random.normal(ks[4], (C, C), jnp.float32),
        "bproj": scale * jax.random.normal(ks[5], (1, C), jnp.float32),
        "g2":    1.0 + scale * jax.random.normal(ks[6], (1, C), jnp.float32),
        "b2":    scale * jax.random.normal(ks[7], (1, C), jnp.float32),
    }
    x = jax.random.normal(ks[8], (B, T, C), jnp.float32)

    out = block_forward(x, params, n_head, q_block=8)
    out = jax.block_until_ready(out)

    ref = _ref_block(x, params, n_head)
    assert out.shape == (B, T, C)
    # bf16 MXU operands + approx reciprocal -> relaxed tolerance vs fp32 ref.
    np.testing.assert_allclose(np.asarray(out), np.asarray(ref),
                               rtol=2e-2, atol=2e-2)

    # TODO(synk): the MLP submodule exists in Block.__init__ but is never
    # invoked in Block.forward as written, so it is intentionally not computed.
    print("KERNEL_OK")
</pallas_src>

<mosaic_0001>
module attributes {stable_mosaic.version = 11 : i64} {
  func.func @_attn_residual_kernel(%arg0: i32, %arg1: i32, %arg2: memref<1x16x32xf32, #tpu.memory_space<vmem>>, %arg3: memref<1x32xf32, #tpu.memory_space<vmem>>, %arg4: memref<1x32xf32, #tpu.memory_space<vmem>>, %arg5: memref<32x96xbf16, #tpu.memory_space<vmem>>, %arg6: memref<1x96xf32, #tpu.memory_space<vmem>>, %arg7: memref<4x8x32xbf16, #tpu.memory_space<vmem>>, %arg8: memref<1x32xf32, #tpu.memory_space<vmem>>, %arg9: memref<1x8x32xf32, #tpu.memory_space<vmem>>, %arg10: memref<4x16x8xf32, #tpu.memory_space<vmem>>, %arg11: memref<4x16x8xbf16, #tpu.memory_space<vmem>>, %arg12: memref<4x16x8xbf16, #tpu.memory_space<vmem>>) attributes {dimension_semantics = [#tpu.dimension_semantics<parallel>, #tpu.dimension_semantics<arbitrary>], iteration_bounds = array<i64: 2, 2>, scalar_prefetch = 0 : i64, scratch_operands = 3 : i64, tpu.core_type = #tpu.core_type<tc>, window_params = [{transform_indices = @transform_0, window_bounds = array<i64: 1, 16, 32>}, {pipeline_mode = #tpu.pipeline_mode<synchronous>, transform_indices = @transform_1, window_bounds = array<i64: 1, 32>}, {pipeline_mode = #tpu.pipeline_mode<synchronous>, transform_indices = @transform_2, window_bounds = array<i64: 1, 32>}, {pipeline_mode = #tpu.pipeline_mode<synchronous>, transform_indices = @transform_3, window_bounds = array<i64: 32, 96>}, {pipeline_mode = #tpu.pipeline_mode<synchronous>, transform_indices = @transform_4, window_bounds = array<i64: 1, 96>}, {pipeline_mode = #tpu.pipeline_mode<synchronous>, transform_indices = @transform_5, window_bounds = array<i64: 4, 8, 32>}, {pipeline_mode = #tpu.pipeline_mode<synchronous>, transform_indices = @transform_6, window_bounds = array<i64: 1, 32>}, {transform_indices = @transform_7, window_bounds = array<i64: 1, 8, 32>}]} {
    %c0_i32 = arith.constant 0 : i32
    %0 = arith.cmpi eq, %arg1, %c0_i32 : i32
    %1 = arith.extui %0 : i1 to i32
    %c0_i32_0 = arith.constant 0 : i32
    %2 = arith.cmpi ne, %1, %c0_i32_0 : i32
    scf.if %2 {
      %c0_32 = arith.constant 0 : index
      %c0_33 = arith.constant 0 : index
      %c0_34 = arith.constant 0 : index
      %59 = vector.load %arg2[%c0_32, %c0_33, %c0_34] : memref<1x16x32xf32, #tpu.memory_space<vmem>>, vector<1x16x32xf32>
      %60 = vector.shape_cast %59 : vector<1x16x32xf32> to vector<16x32xf32>
      %cst_35 = arith.constant dense<0.000000e+00> : vector<16xf32>
      %61 = vector.multi_reduction <add>, %60, %cst_35 [1] : vector<16x32xf32> to vector<16xf32>
      %62 = vector.shape_cast %61 : vector<16xf32> to vector<16x1xf32>
      %cst_36 = arith.constant 3.200000e+01 : f32
      %63 = vector.broadcast %cst_36 : f32 to vector<16x1xf32>
      %64 = arith.divf %62, %63 : vector<16x1xf32>
      %65 = vector.broadcast %64 : vector<16x1xf32> to vector<16x32xf32>
      %66 = arith.subf %60, %65 : vector<16x32xf32>
      %67 = arith.mulf %66, %66 : vector<16x32xf32>
      %cst_37 = arith.constant dense<0.000000e+00> : vector<16xf32>
      %68 = vector.multi_reduction <add>, %67, %cst_37 [1] : vector<16x32xf32> to vector<16xf32>
      %69 = vector.shape_cast %68 : vector<16xf32> to vector<16x1xf32>
      %cst_38 = arith.constant 3.200000e+01 : f32
      %70 = vector.broadcast %cst_38 : f32 to vector<16x1xf32>
      %71 = arith.divf %69, %70 : vector<16x1xf32>
      %cst_39 = arith.constant 9.99999974E-6 : f32
      %72 = vector.broadcast %cst_39 : f32 to vector<16x1xf32>
      %73 = arith.addf %71, %72 : vector<16x1xf32>
      %74 = math.rsqrt %73 : vector<16x1xf32>
      %75 = vector.broadcast %74 : vector<16x1xf32> to vector<16x32xf32>
      %76 = arith.mulf %66, %75 : vector<16x32xf32>
      %c0_40 = arith.constant 0 : index
      %c0_41 = arith.constant 0 : index
      %77 = vector.load %arg3[%c0_40, %c0_41] : memref<1x32xf32, #tpu.memory_space<vmem>>, vector<1x32xf32>
      %78 = vector.broadcast %77 : vector<1x32xf32> to vector<16x32xf32>
      %79 = arith.mulf %76, %78 : vector<16x32xf32>
      %c0_42 = arith.constant 0 : index
      %c0_43 = arith.constant 0 : index
      %80 = vector.load %arg4[%c0_42, %c0_43] : memref<1x32xf32, #tpu.memory_space<vmem>>, vector<1x32xf32>
      %81 = vector.broadcast %80 : vector<1x32xf32> to vector<16x32xf32>
      %82 = arith.addf %79, %81 : vector<16x32xf32>
      %83 = arith.truncf %82 : vector<16x32xf32> to vector<16x32xbf16>
      %c0_44 = arith.constant 0 : index
      %c0_45 = arith.constant 0 : index
      %84 = vector.load %arg5[%c0_44, %c0_45] : memref<32x96xbf16, #tpu.memory_space<vmem>>, vector<32x96xbf16>
      %cst_46 = arith.constant dense<0.000000e+00> : vector<16x96xf32>
      %85 = tpu.matmul %83, %84, %cst_46 {dimension_numbers = #tpu.dot_dimension_numbers<[1], [0], [0], [1], [0, 0, 1, 1], [], []>} : vector<16x32xbf16>, vector<32x96xbf16>, vector<16x96xf32> -> vector<16x96xf32>
      %c0_47 = arith.constant 0 : index
      %c0_48 = arith.constant 0 : index
      %86 = vector.load %arg6[%c0_47, %c0_48] : memref<1x96xf32, #tpu.memory_space<vmem>>, vector<1x96xf32>
      %87 = vector.broadcast %86 : vector<1x96xf32> to vector<16x96xf32>
      %88 = arith.addf %85, %87 : vector<16x96xf32>
      %89 = vector.extract_strided_slice %88 {offsets = [0, 0], sizes = [16, 8], strides = [1, 1]} : vector<16x96xf32> to vector<16x8xf32>
      %c0_49 = arith.constant 0 : index
      %c0_50 = arith.constant 0 : index
      %c0_51 = arith.constant 0 : index
      %90 = vector.load %arg10[%c0_49, %c0_50, %c0_51] : memref<4x16x8xf32, #tpu.memory_space<vmem>>, vector<1x16x8xf32>
      %91 = vector.shape_cast %90 : vector<1x16x8xf32> to vector<16x8xf32>
      %92 = vector.shape_cast %89 : vector<16x8xf32> to vector<1x16x8xf32>
      tpu.vector_store %arg10[%c0_49, %c0_50, %c0_51], %92 {strides = array<i32>} : memref<4x16x8xf32, #tpu.memory_space<vmem>>, vector<1x16x8xf32>,
      %93 = vector.extract_strided_slice %88 {offsets = [0, 32], sizes = [16, 8], strides = [1, 1]} : vector<16x96xf32> to vector<16x8xf32>
      %94 = arith.truncf %93 : vector<16x8xf32> to vector<16x8xbf16>
      %c0_52 = arith.constant 0 : index
      %c0_53 = arith.constant 0 : index
      %c0_54 = arith.constant 0 : index
      %95 = vector.load %arg11[%c0_52, %c0_53, %c0_54] : memref<4x16x8xbf16, #tpu.memory_space<vmem>>, vector<1x16x8xbf16>
      %96 = vector.shape_cast %95 : vector<1x16x8xbf16> to vector<16x8xbf16>
      %97 = vector.shape_cast %94 : vector<16x8xbf16> to vector<1x16x8xbf16>
      tpu.vector_store %arg11[%c0_52, %c0_53, %c0_54], %97 {strides = array<i32>} : memref<4x16x8xbf16, #tpu.memory_space<vmem>>, vector<1x16x8xbf16>,
      %98 = vector.extract_strided_slice %88 {offsets = [0, 64], sizes = [16, 8], strides = [1, 1]} : vector<16x96xf32> to vector<16x8xf32>
      %99 = arith.truncf %98 : vector<16x8xf32> to vector<16x8xbf16>
      %c0_55 = arith.constant 0 : index
      %c0_56 = arith.constant 0 : index
      %c0_57 = arith.constant 0 : index
      %100 = vector.load %arg12[%c0_55, %c0_56, %c0_57] : memref<4x16x8xbf16, #tpu.memory_space<vmem>>, vector<1x16x8xbf16>
      %101 = vector.shape_cast %100 : vector<1x16x8xbf16> to vector<16x8xbf16>
      %102 = vector.shape_cast %99 : vector<16x8xbf16> to vector<1x16x8xbf16>
      tpu.vector_store %arg12[%c0_55, %c0_56, %c0_57], %102 {strides = array<i32>} : memref<4x16x8xbf16, #tpu.memory_space<vmem>>, vector<1x16x8xbf16>,
      %103 = vector.extract_strided_slice %88 {offsets = [0, 8], sizes = [16, 8], strides = [1, 1]} : vector<16x96xf32> to vector<16x8xf32>
      %c1_58 = arith.constant 1 : index
      %c0_59 = arith.constant 0 : index
      %c0_60 = arith.constant 0 : index
      %104 = vector.load %arg10[%c1_58, %c0_59, %c0_60] : memref<4x16x8xf32, #tpu.memory_space<vmem>>, vector<1x16x8xf32>
      %105 = vector.shape_cast %104 : vector<1x16x8xf32> to vector<16x8xf32>
      %106 = vector.shape_cast %103 : vector<16x8xf32> to vector<1x16x8xf32>
      tpu.vector_store %arg10[%c1_58, %c0_59, %c0_60], %106 {strides = array<i32>} : memref<4x16x8xf32, #tpu.memory_space<vmem>>, vector<1x16x8xf32>,
      %107 = vector.extract_strided_slice %88 {offsets = [0, 40], sizes = [16, 8], strides = [1, 1]} : vector<16x96xf32> to vector<16x8xf32>
      %108 = arith.truncf %107 : vector<16x8xf32> to vector<16x8xbf16>
      %c1_61 = arith.constant 1 : index
      %c0_62 = arith.constant 0 : index
      %c0_63 = arith.constant 0 : index
      %109 = vector.load %arg11[%c1_61, %c0_62, %c0_63] : memref<4x16x8xbf16, #tpu.memory_space<vmem>>, vector<1x16x8xbf16>
      %110 = vector.shape_cast %109 : vector<1x16x8xbf16> to vector<16x8xbf16>
      %111 = vector.shape_cast %108 : vector<16x8xbf16> to vector<1x16x8xbf16>
      tpu.vector_store %arg11[%c1_61, %c0_62, %c0_63], %111 {strides = array<i32>} : memref<4x16x8xbf16, #tpu.memory_space<vmem>>, vector<1x16x8xbf16>,
      %112 = vector.extract_strided_slice %88 {offsets = [0, 72], sizes = [16, 8], strides = [1, 1]} : vector<16x96xf32> to vector<16x8xf32>
      %113 = arith.truncf %112 : vector<16x8xf32> to vector<16x8xbf16>
      %c1_64 = arith.constant 1 : index
      %c0_65 = arith.constant 0 : index
      %c0_66 = arith.constant 0 : index
      %114 = vector.load %arg12[%c1_64, %c0_65, %c0_66] : memref<4x16x8xbf16, #tpu.memory_space<vmem>>, vector<1x16x8xbf16>
      %115 = vector.shape_cast %114 : vector<1x16x8xbf16> to vector<16x8xbf16>
      %116 = vector.shape_cast %113 : vector<16x8xbf16> to vector<1x16x8xbf16>
      tpu.vector_store %arg12[%c1_64, %c0_65, %c0_66], %116 {strides = array<i32>} : memref<4x16x8xbf16, #tpu.memory_space<vmem>>, vector<1x16x8xbf16>,
      %117 = vector.extract_strided_slice %88 {offsets = [0, 16], sizes = [16, 8], strides = [1, 1]} : vector<16x96xf32> to vector<16x8xf32>
      %c2_67 = arith.constant 2 : index
      %c0_68 = arith.constant 0 : index
      %c0_69 = arith.constant 0 : index
      %118 = vector.load %arg10[%c2_67, %c0_68, %c0_69] : memref<4x16x8xf32, #tpu.memory_space<vmem>>, vector<1x16x8xf32>
      %119 = vector.shape_cast %118 : vector<1x16x8xf32> to vector<16x8xf32>
      %120 = vector.shape_cast %117 : vector<16x8xf32> to vector<1x16x8xf32>
      tpu.vector_store %arg10[%c2_67, %c0_68, %c0_69], %120 {strides = array<i32>} : memref<4x16x8xf32, #tpu.memory_space<vmem>>, vector<1x16x8xf32>,
      %121 = vector.extract_strided_slice %88 {offsets = [0, 48], sizes = [16, 8], strides = [1, 1]} : vector<16x96xf32> to vector<16x8xf32>
      %122 = arith.truncf %121 : vector<16x8xf32> to vector<16x8xbf16>
      %c2_70 = arith.constant 2 : index
      %c0_71 = arith.constant 0 : index
      %c0_72 = arith.constant 0 : index
      %123 = vector.load %arg11[%c2_70, %c0_71, %c0_72] : memref<4x16x8xbf16, #tpu.memory_space<vmem>>, vector<1x16x8xbf16>
      %124 = vector.shape_cast %123 : vector<1x16x8xbf16> to vector<16x8xbf16>
      %125 = vector.shape_cast %122 : vector<16x8xbf16> to vector<1x16x8xbf16>
      tpu.vector_store %arg11[%c2_70, %c0_71, %c0_72], %125 {strides = array<i32>} : memref<4x16x8xbf16, #tpu.memory_space<vmem>>, vector<1x16x8xbf16>,
      %126 = vector.extract_strided_slice %88 {offsets = [0, 80], sizes = [16, 8], strides = [1, 1]} : vector<16x96xf32> to vector<16x8xf32>
      %127 = arith.truncf %126 : vector<16x8xf32> to vector<16x8xbf16>
      %c2_73 = arith.constant 2 : index
      %c0_74 = arith.constant 0 : index
      %c0_75 = arith.constant 0 : index
      %128 = vector.load %arg12[%c2_73, %c0_74, %c0_75] : memref<4x16x8xbf16, #tpu.memory_space<vmem>>, vector<1x16x8xbf16>
      %129 = vector.shape_cast %128 : vector<1x16x8xbf16> to vector<16x8xbf16>
      %130 = vector.shape_cast %127 : vector<16x8xbf16> to vector<1x16x8xbf16>
      tpu.vector_store %arg12[%c2_73, %c0_74, %c0_75], %130 {strides = array<i32>} : memref<4x16x8xbf16, #tpu.memory_space<vmem>>, vector<1x16x8xbf16>,
      %131 = vector.extract_strided_slice %88 {offsets = [0, 24], sizes = [16, 8], strides = [1, 1]} : vector<16x96xf32> to vector<16x8xf32>
      %c3_76 = arith.constant 3 : index
      %c0_77 = arith.constant 0 : index
      %c0_78 = arith.constant 0 : index
      %132 = vector.load %arg10[%c3_76, %c0_77, %c0_78] : memref<4x16x8xf32, #tpu.memory_space<vmem>>, vector<1x16x8xf32>
      %133 = vector.shape_cast %132 : vector<1x16x8xf32> to vector<16x8xf32>
      %134 = vector.shape_cast %131 : vector<16x8xf32> to vector<1x16x8xf32>
      tpu.vector_store %arg10[%c3_76, %c0_77, %c0_78], %134 {strides = array<i32>} : memref<4x16x8xf32, #tpu.memory_space<vmem>>, vector<1x16x8xf32>,
      %135 = vector.extract_strided_slice %88 {offsets = [0, 56], sizes = [16, 8], strides = [1, 1]} : vector<16x96xf32> to vector<16x8xf32>
      %136 = arith.truncf %135 : vector<16x8xf32> to vector<16x8xbf16>
      %c3_79 = arith.constant 3 : index
      %c0_80 = arith.constant 0 : index
      %c0_81 = arith.constant 0 : index
      %137 = vector.load %arg11[%c3_79, %c0_80, %c0_81] : memref<4x16x8xbf16, #tpu.memory_space<vmem>>, vector<1x16x8xbf16>
      %138 = vector.shape_cast %137 : vector<1x16x8xbf16> to vector<16x8xbf16>
      %139 = vector.shape_cast %136 : vector<16x8xbf16> to vector<1x16x8xbf16>
      tpu.vector_store %arg11[%c3_79, %c0_80, %c0_81], %139 {strides = array<i32>} : memref<4x16x8xbf16, #tpu.memory_space<vmem>>, vector<1x16x8xbf16>,
      %140 = vector.extract_strided_slice %88 {offsets = [0, 88], sizes = [16, 8], strides = [1, 1]} : vector<16x96xf32> to vector<16x8xf32>
      %141 = arith.truncf %140 : vector<16x8xf32> to vector<16x8xbf16>
      %c3_82 = arith.constant 3 : index
      %c0_83 = arith.constant 0 : index
      %c0_84 = arith.constant 0 : index
      %142 = vector.load %arg12[%c3_82, %c0_83, %c0_84] : memref<4x16x8xbf16, #tpu.memory_space<vmem>>, vector<1x16x8xbf16>
      %143 = vector.shape_cast %142 : vector<1x16x8xbf16> to vector<16x8xbf16>
      %144 = vector.shape_cast %141 : vector<16x8xbf16> to vector<1x16x8xbf16>
      tpu.vector_store %arg12[%c3_82, %c0_83, %c0_84], %144 {strides = array<i32>} : memref<4x16x8xbf16, #tpu.memory_space<vmem>>, vector<1x16x8xbf16>,
    } else {
    }
    %c8_i32 = arith.constant 8 : i32
    %3 = arith.muli %arg1, %c8_i32 : i32
    %4 = tpu.assume_multiple %3, 8 : i32
    %c0 = arith.constant 0 : index
    %5 = arith.index_cast %4 : i32 to index
    %c0_1 = arith.constant 0 : index
    %6 = vector.load %arg10[%c0, %5, %c0_1] : memref<4x16x8xf32, #tpu.memory_space<vmem>>, vector<4x8x8xf32>
    %7 = arith.truncf %6 : vector<4x8x8xf32> to vector<4x8x8xbf16>
    %c0_2 = arith.constant 0 : index
    %c0_3 = arith.constant 0 : index
    %c0_4 = arith.constant 0 : index
    %8 = vector.load %arg11[%c0_2, %c0_3, %c0_4] : memref<4x16x8xbf16, #tpu.memory_space<vmem>>, vector<4x16x8xbf16>
    "tpu.trace_start"() <{level = 10 : i32, message = "hqd,hkd->hqk"}> : () -> ()
    %cst = arith.constant dense<0.000000e+00> : vector<4x8x16xf32>
    %9 = tpu.matmul %7, %8, %cst {dimension_numbers = #tpu.dot_dimension_numbers<[2], [2], [1], [1], [0, 0, 0, 1, 1, 1], [0], [0]>} : vector<4x8x8xbf16>, vector<4x16x8xbf16>, vector<4x8x16xf32> -> vector<4x8x16xf32>
    "tpu.trace_stop"() : () -> ()
    %cst_5 = arith.constant dense<0xFF800000> : vector<4x8xf32>
    %10 = vector.multi_reduction <maximumf>, %9, %cst_5 [2] : vector<4x8x16xf32> to vector<4x8xf32>
    %11 = vector.shape_cast %10 : vector<4x8xf32> to vector<4x8x1xf32>
    %12 = vector.broadcast %11 : vector<4x8x1xf32> to vector<4x8x16xf32>
    %13 = arith.subf %9, %12 : vector<4x8x16xf32>
    %14 = math.exp %13 : vector<4x8x16xf32>
    %cst_6 = arith.constant dense<0.000000e+00> : vector<4x8xf32>
    %15 = vector.multi_reduction <add>, %14, %cst_6 [2] : vector<4x8x16xf32> to vector<4x8xf32>
    %16 = vector.shape_cast %15 : vector<4x8xf32> to vector<4x8x1xf32>
    %17 = tpu.reciprocal %16 {approx = true} : vector<4x8x1xf32> -> vector<4x8x1xf32>
    %18 = vector.broadcast %17 : vector<4x8x1xf32> to vector<4x8x16xf32>
    %19 = arith.mulf %14, %18 : vector<4x8x16xf32>
    %20 = arith.truncf %19 : vector<4x8x16xf32> to vector<4x8x16xbf16>
    %c0_7 = arith.constant 0 : index
    %c0_8 = arith.constant 0 : index
    %c0_9 = arith.constant 0 : index
    %21 = vector.load %arg12[%c0_7, %c0_8, %c0_9] : memref<4x16x8xbf16, #tpu.memory_space<vmem>>, vector<4x16x8xbf16>
    "tpu.trace_start"() <{level = 10 : i32, message = "hqk,hkd->hqd"}> : () -> ()
    %cst_10 = arith.constant dense<0.000000e+00> : vector<4x8x8xf32>
    %22 = tpu.matmul %20, %21, %cst_10 {dimension_numbers = #tpu.dot_dimension_numbers<[2], [1], [1], [2], [0, 0, 0, 1, 1, 2], [0], [0]>} : vector<4x8x16xbf16>, vector<4x16x8xbf16>, vector<4x8x8xf32> -> vector<4x8x8xf32>
    "tpu.trace_stop"() : () -> ()
    %23 = arith.truncf %22 : vector<4x8x8xf32> to vector<4x8x8xbf16>
    %cst_11 = arith.constant 0.000000e+00 : f32
    %24 = vector.broadcast %cst_11 : f32 to vector<8x32xf32>
    %25 = vector.extract_strided_slice %23 {offsets = [0, 0, 0], sizes = [1, 8, 8], strides = [1, 1, 1]} : vector<4x8x8xbf16> to vector<1x8x8xbf16>
    %26 = vector.shape_cast %25 : vector<1x8x8xbf16> to vector<8x8xbf16>
    %c0_12 = arith.constant 0 : index
    %c0_13 = arith.constant 0 : index
    %c0_14 = arith.constant 0 : index
    %27 = vector.load %arg7[%c0_12, %c0_13, %c0_14] : memref<4x8x32xbf16, #tpu.memory_space<vmem>>, vector<1x8x32xbf16>
    %28 = vector.shape_cast %27 : vector<1x8x32xbf16> to vector<8x32xbf16>
    %cst_15 = arith.constant dense<0.000000e+00> : vector<8x32xf32>
    %29 = tpu.matmul %26, %28, %cst_15 {dimension_numbers = #tpu.dot_dimension_numbers<[1], [0], [0], [1], [0, 0, 1, 1], [], []>} : vector<8x8xbf16>, vector<8x32xbf16>, vector<8x32xf32> -> vector<8x32xf32>
    %30 = arith.addf %24, %29 : vector<8x32xf32>
    %31 = vector.extract_strided_slice %23 {offsets = [1, 0, 0], sizes = [1, 8, 8], strides = [1, 1, 1]} : vector<4x8x8xbf16> to vector<1x8x8xbf16>
    %32 = vector.shape_cast %31 : vector<1x8x8xbf16> to vector<8x8xbf16>
    %c1 = arith.constant 1 : index
    %c0_16 = arith.constant 0 : index
    %c0_17 = arith.constant 0 : index
    %33 = vector.load %arg7[%c1, %c0_16, %c0_17] : memref<4x8x32xbf16, #tpu.memory_space<vmem>>, vector<1x8x32xbf16>
    %34 = vector.shape_cast %33 : vector<1x8x32xbf16> to vector<8x32xbf16>
    %cst_18 = arith.constant dense<0.000000e+00> : vector<8x32xf32>
    %35 = tpu.matmul %32, %34, %cst_18 {dimension_numbers = #tpu.dot_dimension_numbers<[1], [0], [0], [1], [0, 0, 1, 1], [], []>} : vector<8x8xbf16>, vector<8x32xbf16>, vector<8x32xf32> -> vector<8x32xf32>
    %36 = arith.addf %30, %35 : vector<8x32xf32>
    %37 = vector.extract_strided_slice %23 {offsets = [2, 0, 0], sizes = [1, 8, 8], strides = [1, 1, 1]} : vector<4x8x8xbf16> to vector<1x8x8xbf16>
    %38 = vector.shape_cast %37 : vector<1x8x8xbf16> to vector<8x8xbf16>
    %c2 = arith.constant 2 : index
    %c0_19 = arith.constant 0 : index
    %c0_20 = arith.constant 0 : index
    %39 = vector.load %arg7[%c2, %c0_19, %c0_20] : memref<4x8x32xbf16, #tpu.memory_space<vmem>>, vector<1x8x32xbf16>
    %40 = vector.shape_cast %39 : vector<1x8x32xbf16> to vector<8x32xbf16>
    %cst_21 = arith.constant dense<0.000000e+00> : vector<8x32xf32>
    %41 = tpu.matmul %38, %40, %cst_21 {dimension_numbers = #tpu.dot_dimension_numbers<[1], [0], [0], [1], [0, 0, 1, 1], [], []>} : vector<8x8xbf16>, vector<8x32xbf16>, vector<8x32xf32> -> vector<8x32xf32>
    %42 = arith.addf %36, %41 : vector<8x32xf32>
    %43 = vector.extract_strided_slice %23 {offsets = [3, 0, 0], sizes = [1, 8, 8], strides = [1, 1, 1]} : vector<4x8x8xbf16> to vector<1x8x8xbf16>
    %44 = vector.shape_cast %43 : vector<1x8x8xbf16> to vector<8x8xbf16>
    %c3 = arith.constant 3 : index
    %c0_22 = arith.constant 0 : index
    %c0_23 = arith.constant 0 : index
    %45 = vector.load %arg7[%c3, %c0_22, %c0_23] : memref<4x8x32xbf16, #tpu.memory_space<vmem>>, vector<1x8x32xbf16>
    %46 = vector.shape_cast %45 : vector<1x8x32xbf16> to vector<8x32xbf16>
    %cst_24 = arith.constant dense<0.000000e+00> : vector<8x32xf32>
    %47 = tpu.matmul %44, %46, %cst_24 {dimension_numbers = #tpu.dot_dimension_numbers<[1], [0], [0], [1], [0, 0, 1, 1], [], []>} : vector<8x8xbf16>, vector<8x32xbf16>, vector<8x32xf32> -> vector<8x32xf32>
    %48 = arith.addf %42, %47 : vector<8x32xf32>
    %c0_25 = arith.constant 0 : index
    %49 = arith.index_cast %4 : i32 to index
    %c0_26 = arith.constant 0 : index
    %50 = vector.load %arg2[%c0_25, %49, %c0_26] : memref<1x16x32xf32, #tpu.memory_space<vmem>>, vector<1x8x32xf32>
    %51 = vector.shape_cast %50 : vector<1x8x32xf32> to vector<8x32xf32>
    %52 = arith.addf %51, %48 : vector<8x32xf32>
    %c0_27 = arith.constant 0 : index
    %c0_28 = arith.constant 0 : index
    %53 = vector.load %arg8[%c0_27, %c0_28] : memref<1x32xf32, #tpu.memory_space<vmem>>, vector<1x32xf32>
    %54 = vector.broadcast %53 : vector<1x32xf32> to vector<8x32xf32>
    %55 = arith.addf %52, %54 : vector<8x32xf32>
    %c0_29 = arith.constant 0 : index
    %c0_30 = arith.constant 0 : index
    %c0_31 = arith.constant 0 : index
    %56 = vector.load %arg9[%c0_29, %c0_30, %c0_31] : memref<1x8x32xf32, #tpu.memory_space<vmem>>, vector<1x8x32xf32>
    %57 = vector.shape_cast %56 : vector<1x8x32xf32> to vector<8x32xf32>
    %58 = vector.shape_cast %55 : vector<8x32xf32> to vector<1x8x32xf32>
    tpu.vector_store %arg9[%c0_29, %c0_30, %c0_31], %58 {strides = array<i32>} : memref<1x8x32xf32, #tpu.memory_space<vmem>>, vector<1x8x32xf32>,
    return
  }
  func.func @transform_0(%arg0: i32, %arg1: i32) -> (i32, i32, i32) {
    %c0_i32 = arith.constant 0 : i32
    %c0_i32_0 = arith.constant 0 : i32
    %c0_i32_1 = arith.constant 0 : i32
    return %arg0, %c0_i32, %c0_i32_0 : i32, i32, i32
  }
  func.func @transform_1(%arg0: i32, %arg1: i32) -> (i32, i32) {
    %c0_i32 = arith.constant 0 : i32
    %c0_i32_0 = arith.constant 0 : i32
    %c0_i32_1 = arith.constant 0 : i32
    return %c0_i32, %c0_i32_0 : i32, i32
  }
  func.func @transform_2(%arg0: i32, %arg1: i32) -> (i32, i32) {
    %c0_i32 = arith.constant 0 : i32
    %c0_i32_0 = arith.constant 0 : i32
    %c0_i32_1 = arith.constant 0 : i32
    return %c0_i32, %c0_i32_0 : i32, i32
  }
  func.func @transform_3(%arg0: i32, %arg1: i32) -> (i32, i32) {
    %c0_i32 = arith.constant 0 : i32
    %c0_i32_0 = arith.constant 0 : i32
    %c0_i32_1 = arith.constant 0 : i32
    return %c0_i32, %c0_i32_0 : i32, i32
  }
  func.func @transform_4(%arg0: i32, %arg1: i32) -> (i32, i32) {
    %c0_i32 = arith.constant 0 : i32
    %c0_i32_0 = arith.constant 0 : i32
    %c0_i32_1 = arith.constant 0 : i32
    return %c0_i32, %c0_i32_0 : i32, i32
  }
  func.func @transform_5(%arg0: i32, %arg1: i32) -> (i32, i32, i32) {
    %c0_i32 = arith.constant 0 : i32
    %c0_i32_0 = arith.constant 0 : i32
    %c0_i32_1 = arith.constant 0 : i32
    %c0_i32_2 = arith.constant 0 : i32
    return %c0_i32, %c0_i32_0, %c0_i32_1 : i32, i32, i32
  }
  func.func @transform_6(%arg0: i32, %arg1: i32) -> (i32, i32) {
    %c0_i32 = arith.constant 0 : i32
    %c0_i32_0 = arith.constant 0 : i32
    %c0_i32_1 = arith.constant 0 : i32
    return %c0_i32, %c0_i32_0 : i32, i32
  }
  func.func @transform_7(%arg0: i32, %arg1: i32) -> (i32, i32, i32) {
    %c0_i32 = arith.constant 0 : i32
    %c0_i32_0 = arith.constant 0 : i32
    return %arg0, %arg1, %c0_i32 : i32, i32, i32
  }
}

</mosaic_0001>

<llo_original>
// kernel: tpu_custom_call.1
$region0: #{tpu_custom_call.1}
  #allocation0 [shape = 'u32[]', space=smem, size = 0x4, offset = 0x4, fixed_abs, tag = 'smem constant byte address 0x4 - core index']
  #allocation1 [shape = 'u32[144,128]{1,0:T(1,128)}', space=vmem, size = 0x12000, scoped, tag = 'internal scratch']
  #allocation2 [shape = 'f32[4,16,8]{2,1,0:T(8,128)}', space=vmem, size = 0x8000, scoped, tag = 'scratch operand']
  #allocation3 [shape = 'bf16[4,16,8]{2,1,0:T(16,128)(2,1)}', space=vmem, size = 0x4000, scoped, tag = 'scratch operand']
  #allocation4 [shape = 'bf16[4,16,8]{2,1,0:T(16,128)(2,1)}', space=vmem, size = 0x4000, scoped, tag = 'scratch operand']
  %s0 = inlined_call_operand.hbm [shape: f32[2,16,32], index: 0, kind: input, shape index: {}]
  %s1 = inlined_call_operand.vmem [shape: f32[1,32], index: 1, kind: input, shape index: {}]
  %s2 = inlined_call_operand.vmem [shape: f32[1,32], index: 2, kind: input, shape index: {}]
  %s3 = inlined_call_operand.hbm [shape: bf16[32,96], index: 3, kind: input, shape index: {}]
  %s4 = inlined_call_operand.hbm [shape: f32[1,96], index: 4, kind: input, shape index: {}]
  %s5 = inlined_call_operand.vmem [shape: bf16[4,8,32], index: 5, kind: input, shape index: {}]
  %s6 = inlined_call_operand.vmem [shape: f32[1,32], index: 6, kind: input, shape index: {}]
  %s7 = inlined_call_operand.hbm [shape: f32[2,16,32], index: 7, kind: output, shape index: {}]
  %s8 = sld [smem:[#allocation0]]
  $region77: #{tpu_custom_call.1} parent=0
    _
  %s10 = ssub.s32 1, %s8
  %s11 = scalar_select 0, %s10, %s8
  $region1: #{tpu_custom_call.1} parent=0
    #allocation5 [shape = 'u8[16384]{0}', space=vmem, size = 0x4000, scoped, tag = 'input window, operand 0']
    #allocation6 [shape = 's32[2]{0}', space=sflag, size = 0x8, scoped, tag = 'scoped memory for tpu_custom_call.1']
    #allocation7 [shape = 's32[2]{0}', space=sflag, size = 0x8, scoped, tag = 'scoped memory for tpu_custom_call.1']
    #allocation8 [shape = 'u8[8192]{0}', space=vmem, size = 0x2000, scoped, tag = 'input window, operand 3, single buffered']
    #allocation9 [shape = 's32[1]{0}', space=sflag, size = 0x4, scoped, tag = 'scoped memory for tpu_custom_call.1']
    #allocation10 [shape = 'u8[512]{0}', space=vmem, size = 0x400, scoped, tag = 'input window, operand 4, single buffered']
    #allocation11 [shape = 'u8[8192]{0}', space=vmem, size = 0x2000, scoped, tag = 'output window, operand 0']
    %12 = vsyncpa [#allocation6], 0
    %s13 = scalar_lea.sflag [#allocation6], 1
    %14 = vsyncpa %s13, 0
    %15 = vsyncpa [#allocation9], 0
    %16 = vsyncpa [#allocation7], 0
    %s17 = scalar_lea.sflag [#allocation7], 1
    %18 = vsyncpa %s17, 0
    loop: start=0, step=1, limit=6
    $region2: #{tpu_custom_call.1} parent=1 // loop_pre_header
      _
    $region3: #{tpu_custom_call.1} parent=1 // loop_header
      %s20 = sphi 0, %s24
      %p21 = scmp.ge.s32.totalorder %s20, 6
      %s27 = sphi 0, %s39
      %s28 = sphi 0, %s35
      %s29 = sphi 0, %s27
      %s30 = sphi 0, %s28
      %s31 = sphi 0, %s29
      %s32 = sphi 0, %s30
      %s42 = sphi 0, %s44
      %s45 = sphi 0, %s42
      %s46 = sphi 0, %s45
      %s62 = sphi 0, %s46
      %s66 = sphi 0, %s66
      %s68 = sphi 0, %s66
      %s69 = sphi 0, %s68
      %s83 = sphi 0, %s69
      %s87 = sphi 0, %s87
      %s89 = sphi 0, %s87
      %s90 = sphi 0, %s89
      %s104 = sphi 0, %s90
      %s108 = sphi 0, %s108
      %s110 = sphi 0, %s108
      %s111 = sphi 0, %s110
      %s125 = sphi 0, %s111
      %s129 = sphi 0, %s129
      %s131 = sphi 0, %s129
      %s132 = sphi 0, %s131
      %s146 = sphi 0, %s132
      %s150 = sphi 0, %s150
      %s152 = sphi 0, %s150
      %s153 = sphi 0, %s152
      %s167 = sphi 0, %s153
      %s171 = sphi 0, %s171
      %s173 = sphi 0, %s171
      %s174 = sphi 0, %s173
      %s188 = sphi 0, %s174
      %s196 = sphi 0, %s198
      %s199 = sphi 0, %s196
      %s200 = sphi 0, %s199
      %s216 = sphi 0, %s200
    $region4: #{tpu_custom_call.1} parent=1 // loop_header_branch
      %23 = sbr.rel (%p21) target = $region8
    $region5: #{tpu_custom_call.1} parent=1 // loop_body
      %s25 = ssub.s32 %s20, 1
      %s26 = ssub.s32 %s20, 2
      %s33 = sadd.s32 1, %s28
      %p34 = scmp.ge.s32.totalorder %s33, 2
      %s35 = scalar_select %p34, 0, %s33
      %s36 = sadd.s32 1, %s27
      %s37 = scalar_select %p34, %s36, %s27
      %p38 = scmp.ge.s32.totalorder %s37, 2
      %s39 = scalar_select %p38, 0, %s37
      %s40 = ssub.s32 %s27, %s39
      %p41 = scmp.eq.s32.totalorder %s40, 0
      %s43 = sadd.s32 %s42, 1
      %s44 = scalar_select %p41, %s42, %s43
      %p47 = pneg %p41
      %p48 = scmp.eq.s32.totalorder %s20, 3
      %p49 = por %p47, %p48
      %p50 = scmp.ne.s32.totalorder %s42, %s45
      %p51 = scmp.eq.s32.totalorder %s20, 0
      %p52 = por %p50, %p51
      %p53 = scmp.ne.s32.totalorder %s42, %s45
      %p54 = scmp.eq.s32.totalorder %s25, 3
      %p55 = por %p53, %p54
      %p56 = scmp.ne.s32.totalorder %s45, %s46
      %p57 = scmp.eq.s32.totalorder %s25, 0
      %p58 = por %p56, %p57
      %p59 = scmp.ne.s32.totalorder %s45, %s46
      %p60 = scmp.eq.s32.totalorder %s26, 3
      %p61 = por %p59, %p60
      %p63 = scmp.ne.s32.totalorder %s46, %s62
      %p64 = scmp.eq.s32.totalorder %s26, 0
      %p65 = por %p63, %p64
      %s67 = sadd.s32 %s66, 1
      %p70 = scmp.eq.s32.totalorder %s20, 3
      %p71 = scmp.ne.s32.totalorder %s66, %s68
      %p72 = scmp.eq.s32.totalorder %s20, 0
      %p73 = por %p71, %p72
      %p74 = scmp.ne.s32.totalorder %s66, %s68
      %p75 = scmp.eq.s32.totalorder %s25, 3
      %p76 = por %p74, %p75
      %p77 = scmp.ne.s32.totalorder %s68, %s69
      %p78 = scmp.eq.s32.totalorder %s25, 0
      %p79 = por %p77, %p78
      %p80 = scmp.ne.s32.totalorder %s68, %s69
      %p81 = scmp.eq.s32.totalorder %s26, 3
      %p82 = por %p80, %p81
      %p84 = scmp.ne.s32.totalorder %s69, %s83
      %p85 = scmp.eq.s32.totalorder %s26, 0
      %p86 = por %p84, %p85
      %s88 = sadd.s32 %s87, 1
      %p91 = scmp.eq.s32.totalorder %s20, 3
      %p92 = scmp.ne.s32.totalorder %s87, %s89
      %p93 = scmp.eq.s32.totalorder %s20, 0
      %p94 = por %p92, %p93
      %p95 = scmp.ne.s32.totalorder %s87, %s89
      %p96 = scmp.eq.s32.totalorder %s25, 3
      %p97 = por %p95, %p96
      %p98 = scmp.ne.s32.totalorder %s89, %s90
      %p99 = scmp.eq.s32.totalorder %s25, 0
      %p100 = por %p98, %p99
      %p101 = scmp.ne.s32.totalorder %s89, %s90
      %p102 = scmp.eq.s32.totalorder %s26, 3
      %p103 = por %p101, %p102
      %p105 = scmp.ne.s32.totalorder %s90, %s104
      %p106 = scmp.eq.s32.totalorder %s26, 0
      %p107 = por %p105, %p106
      %s109 = sadd.s32 %s108, 1
      %p112 = scmp.eq.s32.totalorder %s20, 3
      %p113 = scmp.ne.s32.totalorder %s108, %s110
      %p114 = scmp.eq.s32.totalorder %s20, 0
      %p115 = por %p113, %p114
      %p116 = scmp.ne.s32.totalorder %s108, %s110
      %p117 = scmp.eq.s32.totalorder %s25, 3
      %p118 = por %p116, %p117
      %p119 = scmp.ne.s32.totalorder %s110, %s111
      %p120 = scmp.eq.s32.totalorder %s25, 0
      %p121 = por %p119, %p120
      %p122 = scmp.ne.s32.totalorder %s110, %s111
      %p123 = scmp.eq.s32.totalorder %s26, 3
      %p124 = por %p122, %p123
      %p126 = scmp.ne.s32.totalorder %s111, %s125
      %p127 = scmp.eq.s32.totalorder %s26, 0
      %p128 = por %p126, %p127
      %s130 = sadd.s32 %s129, 1
      %p133 = scmp.eq.s32.totalorder %s20, 3
      %p134 = scmp.ne.s32.totalorder %s129, %s131
      %p135 = scmp.eq.s32.totalorder %s20, 0
      %p136 = por %p134, %p135
      %p137 = scmp.ne.s32.totalorder %s129, %s131
      %p138 = scmp.eq.s32.totalorder %s25, 3
      %p139 = por %p137, %p138
      %p140 = scmp.ne.s32.totalorder %s131, %s132
      %p141 = scmp.eq.s32.totalorder %s25, 0
      %p142 = por %p140, %p141
      %p143 = scmp.ne.s32.totalorder %s131, %s132
      %p144 = scmp.eq.s32.totalorder %s26, 3
      %p145 = por %p143, %p144
      %p147 = scmp.ne.s32.totalorder %s132, %s146
      %p148 = scmp.eq.s32.totalorder %s26, 0
      %p149 = por %p147, %p148
      %s151 = sadd.s32 %s150, 1
      %p154 = scmp.eq.s32.totalorder %s20, 3
      %p155 = scmp.ne.s32.totalorder %s150, %s152
      %p156 = scmp.eq.s32.totalorder %s20, 0
      %p157 = por %p155, %p156
      %p158 = scmp.ne.s32.totalorder %s150, %s152
      %p159 = scmp.eq.s32.totalorder %s25, 3
      %p160 = por %p158, %p159
      %p161 = scmp.ne.s32.totalorder %s152, %s153
      %p162 = scmp.eq.s32.totalorder %s25, 0
      %p163 = por %p161, %p162
      %p164 = scmp.ne.s32.totalorder %s152, %s153
      %p165 = scmp.eq.s32.totalorder %s26, 3
      %p166 = por %p164, %p165
      %p168 = scmp.ne.s32.totalorder %s153, %s167
      %p169 = scmp.eq.s32.totalorder %s26, 0
      %p170 = por %p168, %p169
      %s172 = sadd.s32 %s171, 1
      %p175 = scmp.eq.s32.totalorder %s20, 3
      %p176 = scmp.ne.s32.totalorder %s171, %s173
      %p177 = scmp.eq.s32.totalorder %s20, 0
      %p178 = por %p176, %p177
      %p179 = scmp.ne.s32.totalorder %s171, %s173
      %p180 = scmp.eq.s32.totalorder %s25, 3
      %p181 = por %p179, %p180
      %p182 = scmp.ne.s32.totalorder %s173, %s174
      %p183 = scmp.eq.s32.totalorder %s25, 0
      %p184 = por %p182, %p183
      %p185 = scmp.ne.s32.totalorder %s173, %s174
      %p186 = scmp.eq.s32.totalorder %s26, 3
      %p187 = por %p185, %p186
      %p189 = scmp.ne.s32.totalorder %s174, %s188
      %p190 = scmp.eq.s32.totalorder %s26, 0
      %p191 = por %p189, %p190
      %s192 = ssub.s32 %s27, %s39
      %s193 = ssub.s32 %s28, %s35
      %s194 = sor.u32 %s192, %s193
      %p195 = scmp.eq.s32.totalorder %s194, 0
      %s197 = sadd.s32 %s196, 1
      %s198 = scalar_select %p195, %s196, %s197
      %p201 = pneg %p195
      %p202 = scmp.eq.s32.totalorder %s20, 3
      %p203 = por %p201, %p202
      %p204 = scmp.ne.s32.totalorder %s196, %s199
      %p205 = scmp.eq.s32.totalorder %s20, 0
      %p206 = por %p204, %p205
      %p207 = scmp.ne.s32.totalorder %s196, %s199
      %p208 = scmp.eq.s32.totalorder %s25, 3
      %p209 = por %p207, %p208
      %p210 = scmp.ne.s32.totalorder %s199, %s200
      %p211 = scmp.eq.s32.totalorder %s25, 0
      %p212 = por %p210, %p211
      %p213 = scmp.ne.s32.totalorder %s199, %s200
      %p214 = scmp.eq.s32.totalorder %s26, 3
      %p215 = por %p213, %p214
      %p217 = scmp.ne.s32.totalorder %s200, %s216
      %p218 = scmp.eq.s32.totalorder %s26, 0
      %p219 = por %p217, %p218
      %p220 = scmp.le.s32.totalorder 1, %s20
      %p221 = scmp.lt.s32.totalorder %s20, 5
      %p222 = pnand %p220, %p221
      %p223 = pneg %p222
      // Predicated region
      $region9: #{tpu_custom_call.1} parent=5 // pred_check
        _
      $region10: #{tpu_custom_call.1} parent=5 // pred_check_branch
        %225 = sbr.rel (%p222) target = $region12
      $region11: #{tpu_custom_call.1} parent=5 // pred_region
        %s226 = ssub.s32 %s20, 1
        // Predicated region
        $region13: #{tpu_custom_call.1} parent=11 // pred_check
          %p227 = pneg %p79
        $region14: #{tpu_custom_call.1} parent=11 // pred_check_branch
          %229 = sbr.rel (%p227) target = $region16
        $region15: #{tpu_custom_call.1} parent=11 // pred_region
          _
        $region16: #{tpu_custom_call.1} parent=11 // pred_fallthru
          _
        // Predicated region
        $region17: #{tpu_custom_call.1} parent=11 // pred_check
          %p230 = pneg %p100
        $region18: #{tpu_custom_call.1} parent=11 // pred_check_branch
          %232 = sbr.rel (%p230) target = $region20
        $region19: #{tpu_custom_call.1} parent=11 // pred_region
          _
        $region20: #{tpu_custom_call.1} parent=11 // pred_fallthru
          _
        // Predicated region
        $region21: #{tpu_custom_call.1} parent=11 // pred_check
          %p233 = pneg %p121
        $region22: #{tpu_custom_call.1} parent=11 // pred_check_branch
          %235 = sbr.rel (%p233) target = $region24
        $region23: #{tpu_custom_call.1} parent=11 // pred_region
          %s237 = ssub.s32 256, 256
          %238 = vsyncadd [#allocation9], %s237
          %s239 = sshll.u32 [#allocation8], 4
          %s240 = int_to_ptr.vmem [resolvable:$true] %s239
          %245 = dma.hbm_to_vmem [thread:$0]  %s3, 256, %s240, [#allocation9], 64, 64, 4
        $region24: #{tpu_custom_call.1} parent=11 // pred_fallthru
          _
        // Predicated region
        $region25: #{tpu_custom_call.1} parent=11 // pred_check
          %p246 = pneg %p142
        $region26: #{tpu_custom_call.1} parent=11 // pred_check_branch
          %248 = sbr.rel (%p246) target = $region28
        $region27: #{tpu_custom_call.1} parent=11 // pred_region
          %s250 = ssub.s32 16, 16
          %251 = vsyncadd [#allocation9], %s250
          %s253 = sshll.u32 [#allocation10], 4
          %s254 = int_to_ptr.vmem [resolvable:$true] %s253
          %256 = dma.hbm_to_vmem [thread:$0]  %s4, 16, %s254, [#allocation9]
        $region28: #{tpu_custom_call.1} parent=11 // pred_fallthru
          _
        // Predicated region
        $region29: #{tpu_custom_call.1} parent=11 // pred_check
          %p257 = pneg %p163
        $region30: #{tpu_custom_call.1} parent=11 // pred_check_branch
          %259 = sbr.rel (%p257) target = $region32
        $region31: #{tpu_custom_call.1} parent=11 // pred_region
          _
        $region32: #{tpu_custom_call.1} parent=11 // pred_fallthru
          _
        // Predicated region
        $region33: #{tpu_custom_call.1} parent=11 // pred_check
          %p260 = pneg %p184
        $region34: #{tpu_custom_call.1} parent=11 // pred_check_branch
          %262 = sbr.rel (%p260) target = $region36
        $region35: #{tpu_custom_call.1} parent=11 // pred_region
          _
        $region36: #{tpu_custom_call.1} parent=11 // pred_fallthru
          _
      $region12: #{tpu_custom_call.1} parent=5 // pred_fallthru
        _
      %p263 = scmp.lt.s32.totalorder %s20, 4
      // Predicated region
      $region37: #{tpu_custom_call.1} parent=5 // pred_check
        %p264 = pneg %p263
      $region38: #{tpu_custom_call.1} parent=5 // pred_check_branch
        %266 = sbr.rel (%p264) target = $region40
      $region39: #{tpu_custom_call.1} parent=5 // pred_region
        // Predicated region
        $region41: #{tpu_custom_call.1} parent=39 // pred_check
          %p267 = pneg %p52
        $region42: #{tpu_custom_call.1} parent=39 // pred_check_branch
          %269 = sbr.rel (%p267) target = $region44
        $region43: #{tpu_custom_call.1} parent=39 // pred_region
          %s270 = sand.u32 %s42, 1
          %s271 = scalar_lea.sflag [#allocation6], %s270
          %s272 = sand.u32 %s42, 1
          %s273 = smul.addr %s272, 16
          %s274 = scalar_lea.vmem [#allocation5], %s273
          %s276 = ssub.s32 256, 256
          %277 = vsyncadd %s271, %s276
          %s278 = smul.addr %s27, 2
          %s279 = smul.addr %s278, 128
          %s280 = scalar_lea.hbm %s0, %s279
          %s281 = sshll.u32 %s274, 4
          %s282 = int_to_ptr.vmem [resolvable:$true] %s281
          %287 = dma.hbm_to_vmem [thread:$0]  %s280, 256, %s282, %s271, 128, 128, 8
        $region44: #{tpu_custom_call.1} parent=39 // pred_fallthru
          _
      $region40: #{tpu_custom_call.1} parent=5 // pred_fallthru
        _
      %p288 = scmp.le.s32.totalorder 1, %s20
      %p289 = scmp.lt.s32.totalorder %s20, 5
      %p290 = pnand %p288, %p289
      %p291 = pneg %p290
      // Predicated region
      $region45: #{tpu_custom_call.1} parent=5 // pred_check
        _
      $region46: #{tpu_custom_call.1} parent=5 // pred_check_branch
        %293 = sbr.rel (%p290) target = $region48
      $region47: #{tpu_custom_call.1} parent=5 // pred_region
        %s294 = ssub.s32 %s20, 1
        %s295 = sand.u32 %s45, 1
        %s296 = scalar_lea.sflag [#allocation6], %s295
        %s297 = sand.u32 %s45, 1
        %s298 = smul.addr %s297, 16
        %s299 = scalar_lea.vmem [#allocation5], %s298
        // Predicated region
        $region49: #{tpu_custom_call.1} parent=47 // pred_check
          %p300 = pneg %p58
        $region50: #{tpu_custom_call.1} parent=47 // pred_check_branch
          %302 = sbr.rel (%p300) target = $region52
        $region51: #{tpu_custom_call.1} parent=47 // pred_region
          %303 = dma.done %s296, 256
        $region52: #{tpu_custom_call.1} parent=47 // pred_fallthru
          _
        // Predicated region
        $region53: #{tpu_custom_call.1} parent=47 // pred_check
          %p304 = pneg %p121
        $region54: #{tpu_custom_call.1} parent=47 // pred_check_branch
          %306 = sbr.rel (%p304) target = $region56
        $region55: #{tpu_custom_call.1} parent=47 // pred_region
          %307 = dma.done [#allocation9], 256
        $region56: #{tpu_custom_call.1} parent=47 // pred_fallthru
          _
        // Predicated region
        $region57: #{tpu_custom_call.1} parent=47 // pred_check
          %p308 = pneg %p142
        $region58: #{tpu_custom_call.1} parent=47 // pred_check_branch
          %310 = sbr.rel (%p308) target = $region60
        $region59: #{tpu_custom_call.1} parent=47 // pred_region
          %311 = dma.done [#allocation9], 16
        $region60: #{tpu_custom_call.1} parent=47 // pred_fallthru
          _
        %s312 = sand.u32 %s45, 1
        %s313 = scalar_lea.sflag [#allocation6], %s312
        %s314 = sand.u32 %s45, 1
        %s315 = smul.addr %s314, 16
        %s316 = scalar_lea.vmem [#allocation5], %s315
        %p317 = pneg %p58
        %p318 = pneg %p55
        %p319 = pneg %p79
        %p320 = pneg %p76
        %p321 = pneg %p100
        %p322 = pneg %p97
        %p323 = pneg %p121
        %p324 = pneg %p118
        %p325 = pneg %p142
        %p326 = pneg %p139
        %p327 = pneg %p163
        %p328 = pneg %p160
        %p329 = pneg %p184
        %p330 = pneg %p181
        %p331 = pneg %p212
        %p332 = pneg %p209
        %s333 = sand.u32 %s199, 1
        %s334 = scalar_lea.sflag [#allocation7], %s333
        %s335 = sand.u32 %s199, 1
        %s336 = smul.addr %s335, 8
        %s337 = scalar_lea.vmem [#allocation11], %s336
        %p339 = scmp.eq.s32.totalorder %s30, 0
        // Predicated region
        $region61: #{tpu_custom_call.1} parent=47 // pred_check
          %p340 = pneg %p339
        $region62: #{tpu_custom_call.1} parent=47 // pred_check_branch
          %342 = sbr.rel (%p340) target = $region64
        $region63: #{tpu_custom_call.1} parent=47 // pred_region
          %v343 = vld [vmem:[%s299] sm:$0xff]
          %v344 = vld [vmem:[%s299 + $0x8] sm:$0xff]
          %vm345 = vcmask 261120
          %v346 = vsel %vm345, %v343, 0.0
          %347 = vadd.xlane.f32.xlu0 %v346
          %v348 = vpop.xlane.xlu0 %347
          %v349 = vsel %vm345, %v344, 0.0
          %350 = vadd.xlane.f32.xlu0 %v349
          %v351 = vpop.xlane.xlu0 %350
          %v352 = vrcp.pop 32.0
          %v353 = vmul.f32 %v348, %v352
          %v354 = vmul.f32 %v351, %v352
          %v355 = vsub.f32 %v343, %v353
          %v356 = vsub.f32 %v344, %v354
          %v357 = vmul.f32 %v355, %v355
          %v358 = vmul.f32 %v356, %v356
          %v359 = vsel %vm345, %v357, 0.0
          %360 = vadd.xlane.f32.xlu0 %v359
          %v361 = vpop.xlane.xlu0 %360
          %v362 = vsel %vm345, %v358, 0.0
          %363 = vadd.xlane.f32.xlu0 %v362
          %v364 = vpop.xlane.xlu0 %363
          %v365 = vmul.f32 %v361, %v352
          %v366 = vmul.f32 %v364, %v352
          %v367 = vadd.f32 %v365, 1e-05
          %v368 = vadd.f32 %v366, 1e-05
          %v369 = vrsqrt.pop %v367
          %v370 = vrsqrt.pop %v368
          %v371 = vmul.f32 %v355, %v369
          %v372 = vmul.f32 %v356, %v370
          %v373 = vld [vmem:[%s1] sm:$0x1]
          %v375 = vlaneseq
          %v376 = vshrl.u32 %v375, 7
          %v377 = vsub.s32 0, %v376
          %v378 = vrot.slane %v373, %v377
          %v380 = vmul.f32 %v371, %v378
          %v381 = vmul.f32 %v372, %v378
          %v382 = vld [vmem:[%s2] sm:$0x1]
          %v384 = vlaneseq
          %v385 = vshrl.u32 %v384, 7
          %v386 = vsub.s32 0, %v385
          %v387 = vrot.slane %v382, %v386
          %v389 = vadd.f32 %v380, %v387
          %v390 = vadd.f32 %v381, %v387
          %v391 = vpack.c.bf16 %v390, %v389
          %v392 = vld [vmem:[#allocation8] sm:$0xf]
          %v393 = vld [vmem:[#allocation8 + $0x4] sm:$0xf]
          %v394 = vld [vmem:[#allocation8 + $0x8] sm:$0xf]
          %v395 = vld [vmem:[#allocation8 + $0xc] sm:$0xf]
          %v396 = vld [vmem:[#allocation10] sm:$0x1]
          %v398 = vlaneseq
          %v399 = vshrl.u32 %v398, 7
          %v400 = vsub.s32 0, %v399
          %v401 = vrot.slane %v396, %v400
          %v407 = vunpack.c.l.b16 %v392
          %v408 = vunpack.c.l.b16 %v393
          %v409 = vunpack.c.l.b16 %v394
          %v410 = vunpack.c.l.b16 %v395
          %v411 = vpack.c.b16 %v408, %v407
          %v412 = vpack.c.b16 %v410, %v409
          %v416 = vsel %vm345, %v391, 0
          %418 = vmatprep.subr.bf16.mxu0 0
          %419 = vmatpush1.bf16.msra.mxu0 %v411
          %420 = vmatprep.subr.bf16.mxu0 0
          %421 = vmatpush1.bf16.msra.mxu0 %v412
          %422 = vmatprep.subr.bf16.mxu0 0
          %423 = vmatpush1.bf16.msra.mxu0 0
          %424 = vmatprep.subr.bf16.mxu0 0
          %425 = vmatpush1.bf16.msra.mxu0 0
          %426 = vmatprep.subr.bf16.mxu0 0
          %427 = vmatpush1.bf16.msra.mxu0 0
          %428 = vmatprep.subr.bf16.mxu0 0
          %429 = vmatpush1.bf16.msra.mxu0 0
          %430 = vmatprep.subr.bf16.mxu0 0
          %431 = vmatpush1.bf16.msra.mxu0 0
          %432 = vmatprep.subr.bf16.mxu0 0
          %433 = vmatpush1.bf16.msra.mxu0 0
          %434 = vmatprep.subr.bf16.mxu0 0
          %435 = vmatpush1.bf16.msra.mxu0 0
          %436 = vmatprep.subr.bf16.mxu0 0
          %437 = vmatpush1.bf16.msra.mxu0 0
          %438 = vmatprep.subr.bf16.mxu0 0
          %439 = vmatpush1.bf16.msra.mxu0 0
          %440 = vmatprep.subr.bf16.mxu0 0
          %441 = vmatpush1.bf16.msra.mxu0 0
          %442 = vmatprep.subr.bf16.mxu0 0
          %443 = vmatpush1.bf16.msra.mxu0 0
          %444 = vmatprep.subr.bf16.mxu0 0
          %445 = vmatpush1.bf16.msra.mxu0 0
          %446 = vmatprep.subr.bf16.mxu0 0
          %447 = vmatpush1.bf16.msra.mxu0 0
          %448 = vmatprep.subr.bf16.mxu0 0
          %449 = vmatpush1.bf16.msra.mxu0 0
          %450 = vmatprep.mubr.bf16.mxu0 0
          %451 = vmatmul.mubr.bf16.gmra.mrb[0].mxu0 %v416
          %v452 = vpop.f32.mrb[0].mxu0
          %v453 = vadd.f32 %v401, %v452
          %v454 = vpop.f32.mrb[0].mxu0
          %v455 = vpop.f32.mrb[0].mxu0
          %v456 = vadd.f32 %v401, %v455
          %v457 = vpop.f32.mrb[0].mxu0
          %458 = vdwg.mxu0
          %vm459 = vcmask 64512
          %460 = vst.msk [vmem:[#allocation2] sm:$0xff] %vm459, %v453
          %461 = vst.msk [vmem:[#allocation2 + $0x8] sm:$0xff] %vm459, %v456
          %v462 = vpack.c.bf16 %v456, %v453
          %464 = vrot.lane.b32.xlu0 %v462, 96
          %v465 = vpop.permute.xlu0 %464
          %467 = vst.msk [vmem:[#allocation3] sm:$0xff] %vm459, %v465
          %468 = vrot.lane.b32.xlu0 %v462, 64
          %v469 = vpop.permute.xlu0 %468
          %471 = vst.msk [vmem:[#allocation4] sm:$0xff] %vm459, %v469
          %474 = vrot.lane.b32.xlu0 %v453, 120
          %v475 = vpop.permute.xlu0 %474
          %476 = vrot.lane.b32.xlu0 %v456, 120
          %v477 = vpop.permute.xlu0 %476
          %s480 = scalar_lea.vmem [#allocation2], 16
          %481 = vst.msk [vmem:[%s480] sm:$0xff] %vm459, %v475
          %482 = vst.msk [vmem:[%s480 + $0x8] sm:$0xff] %vm459, %v477
          %483 = vrot.lane.b32.xlu0 %v462, 88
          %v484 = vpop.permute.xlu0 %483
          %s486 = scalar_lea.vmem [#allocation3], 8
          %487 = vst.msk [vmem:[%s486] sm:$0xff] %vm459, %v484
          %488 = vrot.lane.b32.xlu0 %v462, 56
          %v489 = vpop.permute.xlu0 %488
          %s491 = scalar_lea.vmem [#allocation4], 8
          %492 = vst.msk [vmem:[%s491] sm:$0xff] %vm459, %v489
          %493 = vrot.lane.b32.xlu0 %v453, 112
          %v494 = vpop.permute.xlu0 %493
          %495 = vrot.lane.b32.xlu0 %v456, 112
          %v496 = vpop.permute.xlu0 %495
          %s499 = scalar_lea.vmem [#allocation2], 32
          %500 = vst.msk [vmem:[%s499] sm:$0xff] %vm459, %v494
          %501 = vst.msk [vmem:[%s499 + $0x8] sm:$0xff] %vm459, %v496
          %502 = vrot.lane.b32.xlu0 %v462, 80
          %v503 = vpop.permute.xlu0 %502
          %s505 = scalar_lea.vmem [#allocation3], 16
          %506 = vst.msk [vmem:[%s505] sm:$0xff] %vm459, %v503
          %507 = vrot.lane.b32.xlu0 %v462, 48
          %v508 = vpop.permute.xlu0 %507
          %s510 = scalar_lea.vmem [#allocation4], 16
          %511 = vst.msk [vmem:[%s510] sm:$0xff] %vm459, %v508
          %512 = vrot.lane.b32.xlu0 %v453, 104
          %v513 = vpop.permute.xlu0 %512
          %514 = vrot.lane.b32.xlu0 %v456, 104
          %v515 = vpop.permute.xlu0 %514
          %s518 = scalar_lea.vmem [#allocation2], 48
          %519 = vst.msk [vmem:[%s518] sm:$0xff] %vm459, %v513
          %520 = vst.msk [vmem:[%s518 + $0x8] sm:$0xff] %vm459, %v515
          %521 = vrot.lane.b32.xlu0 %v462, 72
          %v522 = vpop.permute.xlu0 %521
          %s524 = scalar_lea.vmem [#allocation3], 24
          %525 = vst.msk [vmem:[%s524] sm:$0xff] %vm459, %v522
          %526 = vrot.lane.b32.xlu0 %v462, 40
          %v527 = vpop.permute.xlu0 %526
          %s529 = scalar_lea.vmem [#allocation4], 24
          %530 = vst.msk [vmem:[%s529] sm:$0xff] %vm459, %v527
        $region64: #{tpu_custom_call.1} parent=47 // pred_fallthru
          _
        %s531 = smul.u32 %s30, 8
        %s532 = scalar_lea.vmem [#allocation2], %s531
        %v533 = vld [vmem:[%s532] sm:$0xff]
        %v534 = vld [vmem:[%s532 + $0x10] sm:$0xff]
        %v535 = vld [vmem:[%s532 + $0x20] sm:$0xff]
        %v536 = vld [vmem:[%s532 + $0x30] sm:$0xff]
        %v537 = vpack.c.bf16 %v533, %v533
        %v538 = vpack.c.bf16 %v534, %v534
        %v539 = vpack.c.bf16 %v535, %v535
        %v540 = vpack.c.bf16 %v536, %v536
        %v541 = vld [vmem:[#allocation3] sm:$0xff]
        %v542 = vld [vmem:[#allocation3 + $0x8] sm:$0xff]
        %v543 = vld [vmem:[#allocation3 + $0x10] sm:$0xff]
        %v544 = vld [vmem:[#allocation3 + $0x18] sm:$0xff]
        %vm545 = vcmask 64512
        %v547 = vsel %vm545, %v537, 0
        %v550 = vsel %vm545, %v541, 0
        %552 = vmatprep.subr.bf16.mxu0 0
        %553 = vmatpush1.bf16.xpose.msra.mxu0 %v550
        %554 = vmatprep.subr.bf16.mxu0 0
        %555 = vmatpush1.bf16.xpose.msra.mxu0 0
        %556 = vmatprep.subr.bf16.mxu0 0
        %557 = vmatpush1.bf16.xpose.msra.mxu0 0
        %558 = vmatprep.subr.bf16.mxu0 0
        %559 = vmatpush1.bf16.xpose.msra.mxu0 0
        %560 = vmatprep.subr.bf16.mxu0 0
        %561 = vmatpush1.bf16.xpose.msra.mxu0 0
        %562 = vmatprep.subr.bf16.mxu0 0
        %563 = vmatpush1.bf16.xpose.msra.mxu0 0
        %564 = vmatprep.subr.bf16.mxu0 0
        %565 = vmatpush1.bf16.xpose.msra.mxu0 0
        %566 = vmatprep.subr.bf16.mxu0 0
        %567 = vmatpush1.bf16.xpose.msra.mxu0 0
        %568 = vmatprep.subr.bf16.mxu0 0
        %569 = vmatpush1.bf16.xpose.msra.mxu0 0
        %570 = vmatprep.subr.bf16.mxu0 0
        %571 = vmatpush1.bf16.xpose.msra.mxu0 0
        %572 = vmatprep.subr.bf16.mxu0 0
        %573 = vmatpush1.bf16.xpose.msra.mxu0 0
        %574 = vmatprep.subr.bf16.mxu0 0
        %575 = vmatpush1.bf16.xpose.msra.mxu0 0
        %576 = vmatprep.subr.bf16.mxu0 0
        %577 = vmatpush1.bf16.xpose.msra.mxu0 0
        %578 = vmatprep.subr.bf16.mxu0 0
        %579 = vmatpush1.bf16.xpose.msra.mxu0 0
        %580 = vmatprep.subr.bf16.mxu0 0
        %581 = vmatpush1.bf16.xpose.msra.mxu0 0
        %582 = vmatprep.subr.bf16.mxu0 0
        %583 = vmatpush1.bf16.xpose.msra.mxu0 0
        %584 = vmatprep.mubr.bf16.mxu0 0
        %585 = vmatmul.mubr.bf16.gmra.mrb[0].mxu0 %v547
        %v586 = vpop.f32.mrb[0].mxu0
        %v587 = vadd.f32 0.0, %v586
        %v588 = vpop.f32.mrb[0].mxu0
        %v589 = vpop.f32.mrb[0].mxu0
        %v590 = vpop.f32.mrb[0].mxu0
        %591 = vdwg.mxu0
        %v593 = vsel %vm545, %v538, 0
        %v596 = vsel %vm545, %v542, 0
        %598 = vmatprep.subr.bf16.mxu0 0
        %599 = vmatpush1.bf16.xpose.msra.mxu0 %v596
        %600 = vmatprep.subr.bf16.mxu0 0
        %601 = vmatpush1.bf16.xpose.msra.mxu0 0
        %602 = vmatprep.subr.bf16.mxu0 0
        %603 = vmatpush1.bf16.xpose.msra.mxu0 0
        %604 = vmatprep.subr.bf16.mxu0 0
        %605 = vmatpush1.bf16.xpose.msra.mxu0 0
        %606 = vmatprep.subr.bf16.mxu0 0
        %607 = vmatpush1.bf16.xpose.msra.mxu0 0
        %608 = vmatprep.subr.bf16.mxu0 0
        %609 = vmatpush1.bf16.xpose.msra.mxu0 0
        %610 = vmatprep.subr.bf16.mxu0 0
        %611 = vmatpush1.bf16.xpose.msra.mxu0 0
        %612 = vmatprep.subr.bf16.mxu0 0
        %613 = vmatpush1.bf16.xpose.msra.mxu0 0
        %614 = vmatprep.subr.bf16.mxu0 0
        %615 = vmatpush1.bf16.xpose.msra.mxu0 0
        %616 = vmatprep.subr.bf16.mxu0 0
        %617 = vmatpush1.bf16.xpose.msra.mxu0 0
        %618 = vmatprep.subr.bf16.mxu0 0
        %619 = vmatpush1.bf16.xpose.msra.mxu0 0
        %620 = vmatprep.subr.bf16.mxu0 0
        %621 = vmatpush1.bf16.xpose.msra.mxu0 0
        %622 = vmatprep.subr.bf16.mxu0 0
        %623 = vmatpush1.bf16.xpose.msra.mxu0 0
        %624 = vmatprep.subr.bf16.mxu0 0
        %625 = vmatpush1.bf16.xpose.msra.mxu0 0
        %626 = vmatprep.subr.bf16.mxu0 0
        %627 = vmatpush1.bf16.xpose.msra.mxu0 0
        %628 = vmatprep.subr.bf16.mxu0 0
        %629 = vmatpush1.bf16.xpose.msra.mxu0 0
        %630 = vmatprep.mubr.bf16.mxu0 0
        %631 = vmatmul.mubr.bf16.gmra.mrb[0].mxu0 %v593
        %v632 = vpop.f32.mrb[0].mxu0
        %v633 = vadd.f32 0.0, %v632
        %v634 = vpop.f32.mrb[0].mxu0
        %v635 = vpop.f32.mrb[0].mxu0
        %v636 = vpop.f32.mrb[0].mxu0
        %637 = vdwg.mxu0
        %v639 = vsel %vm545, %v539, 0
        %v642 = vsel %vm545, %v543, 0
        %644 = vmatprep.subr.bf16.mxu0 0
        %645 = vmatpush1.bf16.xpose.msra.mxu0 %v642
        %646 = vmatprep.subr.bf16.mxu0 0
        %647 = vmatpush1.bf16.xpose.msra.mxu0 0
        %648 = vmatprep.subr.bf16.mxu0 0
        %649 = vmatpush1.bf16.xpose.msra.mxu0 0
        %650 = vmatprep.subr.bf16.mxu0 0
        %651 = vmatpush1.bf16.xpose.msra.mxu0 0
        %652 = vmatprep.subr.bf16.mxu0 0
        %653 = vmatpush1.bf16.xpose.msra.mxu0 0
        %654 = vmatprep.subr.bf16.mxu0 0
        %655 = vmatpush1.bf16.xpose.msra.mxu0 0
        %656 = vmatprep.subr.bf16.mxu0 0
        %657 = vmatpush1.bf16.xpose.msra.mxu0 0
        %658 = vmatprep.subr.bf16.mxu0 0
        %659 = vmatpush1.bf16.xpose.msra.mxu0 0
        %660 = vmatprep.subr.bf16.mxu0 0
        %661 = vmatpush1.bf16.xpose.msra.mxu0 0
        %662 = vmatprep.subr.bf16.mxu0 0
        %663 = vmatpush1.bf16.xpose.msra.mxu0 0
        %664 = vmatprep.subr.bf16.mxu0 0
        %665 = vmatpush1.bf16.xpose.msra.mxu0 0
        %666 = vmatprep.subr.bf16.mxu0 0
        %667 = vmatpush1.bf16.xpose.msra.mxu0 0
        %668 = vmatprep.subr.bf16.mxu0 0
        %669 = vmatpush1.bf16.xpose.msra.mxu0 0
        %670 = vmatprep.subr.bf16.mxu0 0
        %671 = vmatpush1.bf16.xpose.msra.mxu0 0
        %672 = vmatprep.subr.bf16.mxu0 0
        %673 = vmatpush1.bf16.xpose.msra.mxu0 0
        %674 = vmatprep.subr.bf16.mxu0 0
        %675 = vmatpush1.bf16.xpose.msra.mxu0 0
        %676 = vmatprep.mubr.bf16.mxu0 0
        %677 = vmatmul.mubr.bf16.gmra.mrb[0].mxu0 %v639
        %v678 = vpop.f32.mrb[0].mxu0
        %v679 = vadd.f32 0.0, %v678
        %v680 = vpop.f32.mrb[0].mxu0
        %v681 = vpop.f32.mrb[0].mxu0
        %v682 = vpop.f32.mrb[0].mxu0
        %683 = vdwg.mxu0
        %v685 = vsel %vm545, %v540, 0
        %v688 = vsel %vm545, %v544, 0
        %690 = vmatprep.subr.bf16.mxu0 0
        %691 = vmatpush1.bf16.xpose.msra.mxu0 %v688
        %692 = vmatprep.subr.bf16.mxu0 0
        %693 = vmatpush1.bf16.xpose.msra.mxu0 0
        %694 = vmatprep.subr.bf16.mxu0 0
        %695 = vmatpush1.bf16.xpose.msra.mxu0 0
        %696 = vmatprep.subr.bf16.mxu0 0
        %697 = vmatpush1.bf16.xpose.msra.mxu0 0
        %698 = vmatprep.subr.bf16.mxu0 0
        %699 = vmatpush1.bf16.xpose.msra.mxu0 0
        %700 = vmatprep.subr.bf16.mxu0 0
        %701 = vmatpush1.bf16.xpose.msra.mxu0 0
        %702 = vmatprep.subr.bf16.mxu0 0
        %703 = vmatpush1.bf16.xpose.msra.mxu0 0
        %704 = vmatprep.subr.bf16.mxu0 0
        %705 = vmatpush1.bf16.xpose.msra.mxu0 0
        %706 = vmatprep.subr.bf16.mxu0 0
        %707 = vmatpush1.bf16.xpose.msra.mxu0 0
        %708 = vmatprep.subr.bf16.mxu0 0
        %709 = vmatpush1.bf16.xpose.msra.mxu0 0
        %710 = vmatprep.subr.bf16.mxu0 0
        %711 = vmatpush1.bf16.xpose.msra.mxu0 0
        %712 = vmatprep.subr.bf16.mxu0 0
        %713 = vmatpush1.bf16.xpose.msra.mxu0 0
        %714 = vmatprep.subr.bf16.mxu0 0
        %715 = vmatpush1.bf16.xpose.msra.mxu0 0
        %716 = vmatprep.subr.bf16.mxu0 0
        %717 = vmatpush1.bf16.xpose.msra.mxu0 0
        %718 = vmatprep.subr.bf16.mxu0 0
        %719 = vmatpush1.bf16.xpose.msra.mxu0 0
        %720 = vmatprep.subr.bf16.mxu0 0
        %721 = vmatpush1.bf16.xpose.msra.mxu0 0
        %722 = vmatprep.mubr.bf16.mxu0 0
        %723 = vmatmul.mubr.bf16.gmra.mrb[0].mxu0 %v685
        %v724 = vpop.f32.mrb[0].mxu0
        %v725 = vadd.f32 0.0, %v724
        %v726 = vpop.f32.mrb[0].mxu0
        %v727 = vpop.f32.mrb[0].mxu0
        %v728 = vpop.f32.mrb[0].mxu0
        %729 = vdwg.mxu0
        %vm730 = vcmask 130048
        %v731 = vsel %vm730, %v587, -inf
        %732 = vmax.xlane.f32.xlu0 %v731
        %v733 = vpop.xlane.xlu0 %732
        %v734 = vsel %vm730, %v633, -inf
        %735 = vmax.xlane.f32.xlu0 %v734
        %v736 = vpop.xlane.xlu0 %735
        %v737 = vsel %vm730, %v679, -inf
        %738 = vmax.xlane.f32.xlu0 %v737
        %v739 = vpop.xlane.xlu0 %738
        %v740 = vsel %vm730, %v725, -inf
        %741 = vmax.xlane.f32.xlu0 %v740
        %v742 = vpop.xlane.xlu0 %741
        %v743 = vsub.f32 %v587, %v733
        %v744 = vsub.f32 %v633, %v736
        %v745 = vsub.f32 %v679, %v739
        %v746 = vsub.f32 %v725, %v742
        %v747 = vmul.f32 %v743, 1.442695
        %v748 = vpow.pop %v747
        %v749 = vmul.f32 %v744, 1.442695
        %v750 = vpow.pop %v749
        %v751 = vmul.f32 %v745, 1.442695
        %v752 = vpow.pop %v751
        %v753 = vmul.f32 %v746, 1.442695
        %v754 = vpow.pop %v753
        %v755 = vsel %vm730, %v748, 0.0
        %756 = vadd.xlane.f32.xlu0 %v755
        %v757 = vpop.xlane.xlu0 %756
        %v758 = vsel %vm730, %v750, 0.0
        %759 = vadd.xlane.f32.xlu0 %v758
        %v760 = vpop.xlane.xlu0 %759
        %v761 = vsel %vm730, %v752, 0.0
        %762 = vadd.xlane.f32.xlu0 %v761
        %v763 = vpop.xlane.xlu0 %762
        %v764 = vsel %vm730, %v754, 0.0
        %765 = vadd.xlane.f32.xlu0 %v764
        %v766 = vpop.xlane.xlu0 %765
        %v767 = vrcp.pop %v757
        %v768 = vrcp.pop %v760
        %v769 = vrcp.pop %v763
        %v770 = vrcp.pop %v766
        %v771 = vmul.f32 %v748, %v767
        %v772 = vmul.f32 %v750, %v768
        %v773 = vmul.f32 %v752, %v769
        %v774 = vmul.f32 %v754, %v770
        %v775 = vpack.c.bf16 %v771, %v771
        %v776 = vpack.c.bf16 %v772, %v772
        %v777 = vpack.c.bf16 %v773, %v773
        %v778 = vpack.c.bf16 %v774, %v774
        %v779 = vld [vmem:[#allocation4] sm:$0xff]
        %v780 = vld [vmem:[#allocation4 + $0x8] sm:$0xff]
        %v781 = vld [vmem:[#allocation4 + $0x10] sm:$0xff]
        %v782 = vld [vmem:[#allocation4 + $0x18] sm:$0xff]
        %v784 = vsel %vm730, %v775, 0
        %786 = vmatprep.subr.bf16.mxu0 0
        %787 = vmatpush1.bf16.msra.mxu0 %v779
        %788 = vmatprep.subr.bf16.mxu0 0
        %789 = vmatpush1.bf16.msra.mxu0 0
        %790 = vmatprep.subr.bf16.mxu0 0
        %791 = vmatpush1.bf16.msra.mxu0 0
        %792 = vmatprep.subr.bf16.mxu0 0
        %793 = vmatpush1.bf16.msra.mxu0 0
        %794 = vmatprep.subr.bf16.mxu0 0
        %795 = vmatpush1.bf16.msra.mxu0 0
        %796 = vmatprep.subr.bf16.mxu0 0
        %797 = vmatpush1.bf16.msra.mxu0 0
        %798 = vmatprep.subr.bf16.mxu0 0
        %799 = vmatpush1.bf16.msra.mxu0 0
        %800 = vmatprep.subr.bf16.mxu0 0
        %801 = vmatpush1.bf16.msra.mxu0 0
        %802 = vmatprep.subr.bf16.mxu0 0
        %803 = vmatpush1.bf16.msra.mxu0 0
        %804 = vmatprep.subr.bf16.mxu0 0
        %805 = vmatpush1.bf16.msra.mxu0 0
        %806 = vmatprep.subr.bf16.mxu0 0
        %807 = vmatpush1.bf16.msra.mxu0 0
        %808 = vmatprep.subr.bf16.mxu0 0
        %809 = vmatpush1.bf16.msra.mxu0 0
        %810 = vmatprep.subr.bf16.mxu0 0
        %811 = vmatpush1.bf16.msra.mxu0 0
        %812 = vmatprep.subr.bf16.mxu0 0
        %813 = vmatpush1.bf16.msra.mxu0 0
        %814 = vmatprep.subr.bf16.mxu0 0
        %815 = vmatpush1.bf16.msra.mxu0 0
        %816 = vmatprep.subr.bf16.mxu0 0
        %817 = vmatpush1.bf16.msra.mxu0 0
        %818 = vmatprep.mubr.bf16.mxu0 0
        %819 = vmatmul.mubr.bf16.gmra.mrb[0].mxu0 %v784
        %v820 = vpop.f32.mrb[0].mxu0
        %v821 = vadd.f32 0.0, %v820
        %v822 = vpop.f32.mrb[0].mxu0
        %v823 = vpop.f32.mrb[0].mxu0
        %v824 = vpop.f32.mrb[0].mxu0
        %825 = vdwg.mxu0
        %v827 = vsel %vm730, %v776, 0
        %829 = vmatprep.subr.bf16.mxu0 0
        %830 = vmatpush1.bf16.msra.mxu0 %v780
        %831 = vmatprep.subr.bf16.mxu0 0
        %832 = vmatpush1.bf16.msra.mxu0 0
        %833 = vmatprep.subr.bf16.mxu0 0
        %834 = vmatpush1.bf16.msra.mxu0 0
        %835 = vmatprep.subr.bf16.mxu0 0
        %836 = vmatpush1.bf16.msra.mxu0 0
        %837 = vmatprep.subr.bf16.mxu0 0
        %838 = vmatpush1.bf16.msra.mxu0 0
        %839 = vmatprep.subr.bf16.mxu0 0
        %840 = vmatpush1.bf16.msra.mxu0 0
        %841 = vmatprep.subr.bf16.mxu0 0
        %842 = vmatpush1.bf16.msra.mxu0 0
        %843 = vmatprep.subr.bf16.mxu0 0
        %844 = vmatpush1.bf16.msra.mxu0 0
        %845 = vmatprep.subr.bf16.mxu0 0
        %846 = vmatpush1.bf16.msra.mxu0 0
        %847 = vmatprep.subr.bf16.mxu0 0
        %848 = vmatpush1.bf16.msra.mxu0 0
        %849 = vmatprep.subr.bf16.mxu0 0
        %850 = vmatpush1.bf16.msra.mxu0 0
        %851 = vmatprep.subr.bf16.mxu0 0
        %852 = vmatpush1.bf16.msra.mxu0 0
        %853 = vmatprep.subr.bf16.mxu0 0
        %854 = vmatpush1.bf16.msra.mxu0 0
        %855 = vmatprep.subr.bf16.mxu0 0
        %856 = vmatpush1.bf16.msra.mxu0 0
        %857 = vmatprep.subr.bf16.mxu0 0
        %858 = vmatpush1.bf16.msra.mxu0 0
        %859 = vmatprep.subr.bf16.mxu0 0
        %860 = vmatpush1.bf16.msra.mxu0 0
        %861 = vmatprep.mubr.bf16.mxu0 0
        %862 = vmatmul.mubr.bf16.gmra.mrb[0].mxu0 %v827
        %v863 = vpop.f32.mrb[0].mxu0
        %v864 = vadd.f32 0.0, %v863
        %v865 = vpop.f32.mrb[0].mxu0
        %v866 = vpop.f32.mrb[0].mxu0
        %v867 = vpop.f32.mrb[0].mxu0
        %868 = vdwg.mxu0
        %v870 = vsel %vm730, %v777, 0
        %872 = vmatprep.subr.bf16.mxu0 0
        %873 = vmatpush1.bf16.msra.mxu0 %v781
        %874 = vmatprep.subr.bf16.mxu0 0
        %875 = vmatpush1.bf16.msra.mxu0 0
        %876 = vmatprep.subr.bf16.mxu0 0
        %877 = vmatpush1.bf16.msra.mxu0 0
        %878 = vmatprep.subr.bf16.mxu0 0
        %879 = vmatpush1.bf16.msra.mxu0 0
        %880 = vmatprep.subr.bf16.mxu0 0
        %881 = vmatpush1.bf16.msra.mxu0 0
        %882 = vmatprep.subr.bf16.mxu0 0
        %883 = vmatpush1.bf16.msra.mxu0 0
        %884 = vmatprep.subr.bf16.mxu0 0
        %885 = vmatpush1.bf16.msra.mxu0 0
        %886 = vmatprep.subr.bf16.mxu0 0
        %887 = vmatpush1.bf16.msra.mxu0 0
        %888 = vmatprep.subr.bf16.mxu0 0
        %889 = vmatpush1.bf16.msra.mxu0 0
        %890 = vmatprep.subr.bf16.mxu0 0
        %891 = vmatpush1.bf16.msra.mxu0 0
        %892 = vmatprep.subr.bf16.mxu0 0
        %893 = vmatpush1.bf16.msra.mxu0 0
        %894 = vmatprep.subr.bf16.mxu0 0
        %895 = vmatpush1.bf16.msra.mxu0 0
        %896 = vmatprep.subr.bf16.mxu0 0
        %897 = vmatpush1.bf16.msra.mxu0 0
        %898 = vmatprep.subr.bf16.mxu0 0
        %899 = vmatpush1.bf16.msra.mxu0 0
        %900 = vmatprep.subr.bf16.mxu0 0
        %901 = vmatpush1.bf16.msra.mxu0 0
        %902 = vmatprep.subr.bf16.mxu0 0
        %903 = vmatpush1.bf16.msra.mxu0 0
        %904 = vmatprep.mubr.bf16.mxu0 0
        %905 = vmatmul.mubr.bf16.gmra.mrb[0].mxu0 %v870
        %v906 = vpop.f32.mrb[0].mxu0
        %v907 = vadd.f32 0.0, %v906
        %v908 = vpop.f32.mrb[0].mxu0
        %v909 = vpop.f32.mrb[0].mxu0
        %v910 = vpop.f32.mrb[0].mxu0
        %911 = vdwg.mxu0
        %v913 = vsel %vm730, %v778, 0
        %915 = vmatprep.subr.bf16.mxu0 0
        %916 = vmatpush1.bf16.msra.mxu0 %v782
        %917 = vmatprep.subr.bf16.mxu0 0
        %918 = vmatpush1.bf16.msra.mxu0 0
        %919 = vmatprep.subr.bf16.mxu0 0
        %920 = vmatpush1.bf16.msra.mxu0 0
        %921 = vmatprep.subr.bf16.mxu0 0
        %922 = vmatpush1.bf16.msra.mxu0 0
        %923 = vmatprep.subr.bf16.mxu0 0
        %924 = vmatpush1.bf16.msra.mxu0 0
        %925 = vmatprep.subr.bf16.mxu0 0
        %926 = vmatpush1.bf16.msra.mxu0 0
        %927 = vmatprep.subr.bf16.mxu0 0
        %928 = vmatpush1.bf16.msra.mxu0 0
        %929 = vmatprep.subr.bf16.mxu0 0
        %930 = vmatpush1.bf16.msra.mxu0 0
        %931 = vmatprep.subr.bf16.mxu0 0
        %932 = vmatpush1.bf16.msra.mxu0 0
        %933 = vmatprep.subr.bf16.mxu0 0
        %934 = vmatpush1.bf16.msra.mxu0 0
        %935 = vmatprep.subr.bf16.mxu0 0
        %936 = vmatpush1.bf16.msra.mxu0 0
        %937 = vmatprep.subr.bf16.mxu0 0
        %938 = vmatpush1.bf16.msra.mxu0 0
        %939 = vmatprep.subr.bf16.mxu0 0
        %940 = vmatpush1.bf16.msra.mxu0 0
        %941 = vmatprep.subr.bf16.mxu0 0
        %942 = vmatpush1.bf16.msra.mxu0 0
        %943 = vmatprep.subr.bf16.mxu0 0
        %944 = vmatpush1.bf16.msra.mxu0 0
        %945 = vmatprep.subr.bf16.mxu0 0
        %946 = vmatpush1.bf16.msra.mxu0 0
        %947 = vmatprep.mubr.bf16.mxu0 0
        %948 = vmatmul.mubr.bf16.gmra.mrb[0].mxu0 %v913
        %v949 = vpop.f32.mrb[0].mxu0
        %v950 = vadd.f32 0.0, %v949
        %v951 = vpop.f32.mrb[0].mxu0
        %v952 = vpop.f32.mrb[0].mxu0
        %v953 = vpop.f32.mrb[0].mxu0
        %954 = vdwg.mxu0
        %v955 = vpack.c.bf16 %v821, %v821
        %v956 = vpack.c.bf16 %v864, %v864
        %v957 = vpack.c.bf16 %v907, %v907
        %v958 = vpack.c.bf16 %v950, %v950
        %v959 = vld [vmem:[%s5] sm:$0xf]
        %s960 = scalar_lea.vmem %s5, 4
        %v961 = vld [vmem:[%s960] sm:$0xf]
        %v963 = vsel %vm545, %v956, 0
        %vm965 = vcmask 1043456
        %v967 = vsel %vm965, %v961, 0
        %969 = vmatprep.subr.bf16.mxu0 0
        %970 = vmatpush1.bf16.msra.mxu0 %v967
        %971 = vmatprep.subr.bf16.mxu0 0
        %972 = vmatpush1.bf16.msra.mxu0 0
        %973 = vmatprep.subr.bf16.mxu0 0
        %974 = vmatpush1.bf16.msra.mxu0 0
        %975 = vmatprep.subr.bf16.mxu0 0
        %976 = vmatpush1.bf16.msra.mxu0 0
        %977 = vmatprep.subr.bf16.mxu0 0
        %978 = vmatpush1.bf16.msra.mxu0 0
        %979 = vmatprep.subr.bf16.mxu0 0
        %980 = vmatpush1.bf16.msra.mxu0 0
        %981 = vmatprep.subr.bf16.mxu0 0
        %982 = vmatpush1.bf16.msra.mxu0 0
        %983 = vmatprep.subr.bf16.mxu0 0
        %984 = vmatpush1.bf16.msra.mxu0 0
        %985 = vmatprep.subr.bf16.mxu0 0
        %986 = vmatpush1.bf16.msra.mxu0 0
        %987 = vmatprep.subr.bf16.mxu0 0
        %988 = vmatpush1.bf16.msra.mxu0 0
        %989 = vmatprep.subr.bf16.mxu0 0
        %990 = vmatpush1.bf16.msra.mxu0 0
        %991 = vmatprep.subr.bf16.mxu0 0
        %992 = vmatpush1.bf16.msra.mxu0 0
        %993 = vmatprep.subr.bf16.mxu0 0
        %994 = vmatpush1.bf16.msra.mxu0 0
        %995 = vmatprep.subr.bf16.mxu0 0
        %996 = vmatpush1.bf16.msra.mxu0 0
        %997 = vmatprep.subr.bf16.mxu0 0
        %998 = vmatpush1.bf16.msra.mxu0 0
        %999 = vmatprep.subr.bf16.mxu0 0
        %1000 = vmatpush1.bf16.msra.mxu0 0
        %1001 = vmatprep.mubr.bf16.mxu0 0
        %1002 = vmatmul.mubr.bf16.gmra.mrb[0].mxu0 %v963
        %v1003 = vpop.f32.mrb[0].mxu0
        %v1004 = vadd.f32 0.0, %v1003
        %v1005 = vpop.f32.mrb[0].mxu0
        %v1006 = vpop.f32.mrb[0].mxu0
        %v1007 = vpop.f32.mrb[0].mxu0
        %1008 = vdwg.mxu0
        %v1010 = vsel %vm545, %v955, 0
        %v1013 = vsel %vm965, %v959, 0
        %1015 = vmatprep.subr.bf16.mxu0 0
        %1016 = vmatpush1.bf16.msra.mxu0 %v1013
        %1017 = vmatprep.subr.bf16.mxu0 0
        %1018 = vmatpush1.bf16.msra.mxu0 0
        %1019 = vmatprep.subr.bf16.mxu0 0
        %1020 = vmatpush1.bf16.msra.mxu0 0
        %1021 = vmatprep.subr.bf16.mxu0 0
        %1022 = vmatpush1.bf16.msra.mxu0 0
        %1023 = vmatprep.subr.bf16.mxu0 0
        %1024 = vmatpush1.bf16.msra.mxu0 0
        %1025 = vmatprep.subr.bf16.mxu0 0
        %1026 = vmatpush1.bf16.msra.mxu0 0
        %1027 = vmatprep.subr.bf16.mxu0 0
        %1028 = vmatpush1.bf16.msra.mxu0 0
        %1029 = vmatprep.subr.bf16.mxu0 0
        %1030 = vmatpush1.bf16.msra.mxu0 0
        %1031 = vmatprep.subr.bf16.mxu0 0
        %1032 = vmatpush1.bf16.msra.mxu0 0
        %1033 = vmatprep.subr.bf16.mxu0 0
        %1034 = vmatpush1.bf16.msra.mxu0 0
        %1035 = vmatprep.subr.bf16.mxu0 0
        %1036 = vmatpush1.bf16.msra.mxu0 0
        %1037 = vmatprep.subr.bf16.mxu0 0
        %1038 = vmatpush1.bf16.msra.mxu0 0
        %1039 = vmatprep.subr.bf16.mxu0 0
        %1040 = vmatpush1.bf16.msra.mxu0 0
        %1041 = vmatprep.subr.bf16.mxu0 0
        %1042 = vmatpush1.bf16.msra.mxu0 0
        %1043 = vmatprep.subr.bf16.mxu0 0
        %1044 = vmatpush1.bf16.msra.mxu0 0
        %1045 = vmatprep.subr.bf16.mxu0 0
        %1046 = vmatpush1.bf16.msra.mxu0 0
        %1047 = vmatprep.mubr.bf16.mxu0 0
        %1048 = vmatmul.mubr.bf16.gmra.mrb[0].mxu0 %v1010
        %v1049 = vpop.f32.mrb[0].mxu0
        %v1050 = vadd.f32 %v1004, %v1049
        %v1051 = vpop.f32.mrb[0].mxu0
        %v1052 = vpop.f32.mrb[0].mxu0
        %v1053 = vpop.f32.mrb[0].mxu0
        %1054 = vdwg.mxu0
        %s1055 = scalar_lea.vmem %s5, 8
        %v1056 = vld [vmem:[%s1055] sm:$0xf]
        %v1058 = vsel %vm545, %v957, 0
        %v1061 = vsel %vm965, %v1056, 0
        %1063 = vmatprep.subr.bf16.mxu0 0
        %1064 = vmatpush1.bf16.msra.mxu0 %v1061
        %1065 = vmatprep.subr.bf16.mxu0 0
        %1066 = vmatpush1.bf16.msra.mxu0 0
        %1067 = vmatprep.subr.bf16.mxu0 0
        %1068 = vmatpush1.bf16.msra.mxu0 0
        %1069 = vmatprep.subr.bf16.mxu0 0
        %1070 = vmatpush1.bf16.msra.mxu0 0
        %1071 = vmatprep.subr.bf16.mxu0 0
        %1072 = vmatpush1.bf16.msra.mxu0 0
        %1073 = vmatprep.subr.bf16.mxu0 0
        %1074 = vmatpush1.bf16.msra.mxu0 0
        %1075 = vmatprep.subr.bf16.mxu0 0
        %1076 = vmatpush1.bf16.msra.mxu0 0
        %1077 = vmatprep.subr.bf16.mxu0 0
        %1078 = vmatpush1.bf16.msra.mxu0 0
        %1079 = vmatprep.subr.bf16.mxu0 0
        %1080 = vmatpush1.bf16.msra.mxu0 0
        %1081 = vmatprep.subr.bf16.mxu0 0
        %1082 = vmatpush1.bf16.msra.mxu0 0
        %1083 = vmatprep.subr.bf16.mxu0 0
        %1084 = vmatpush1.bf16.msra.mxu0 0
        %1085 = vmatprep.subr.bf16.mxu0 0
        %1086 = vmatpush1.bf16.msra.mxu0 0
        %1087 = vmatprep.subr.bf16.mxu0 0
        %1088 = vmatpush1.bf16.msra.mxu0 0
        %1089 = vmatprep.subr.bf16.mxu0 0
        %1090 = vmatpush1.bf16.msra.mxu0 0
        %1091 = vmatprep.subr.bf16.mxu0 0
        %1092 = vmatpush1.bf16.msra.mxu0 0
        %1093 = vmatprep.subr.bf16.mxu0 0
        %1094 = vmatpush1.bf16.msra.mxu0 0
        %1095 = vmatprep.mubr.bf16.mxu0 0
        %1096 = vmatmul.mubr.bf16.gmra.mrb[0].mxu0 %v1058
        %v1097 = vpop.f32.mrb[0].mxu0
        %v1098 = vadd.f32 0.0, %v1097
        %v1099 = vpop.f32.mrb[0].mxu0
        %v1100 = vpop.f32.mrb[0].mxu0
        %v1101 = vpop.f32.mrb[0].mxu0
        %1102 = vdwg.mxu0
        %v1103 = vadd.f32 %v1050, %v1098
        %s1104 = scalar_lea.vmem %s5, 12
        %v1105 = vld [vmem:[%s1104] sm:$0xf]
        %v1107 = vsel %vm545, %v958, 0
        %v1110 = vsel %vm965, %v1105, 0
        %1112 = vmatprep.subr.bf16.mxu0 0
        %1113 = vmatpush1.bf16.msra.mxu0 %v1110
        %1114 = vmatprep.subr.bf16.mxu0 0
        %1115 = vmatpush1.bf16.msra.mxu0 0
        %1116 = vmatprep.subr.bf16.mxu0 0
        %1117 = vmatpush1.bf16.msra.mxu0 0
        %1118 = vmatprep.subr.bf16.mxu0 0
        %1119 = vmatpush1.bf16.msra.mxu0 0
        %1120 = vmatprep.subr.bf16.mxu0 0
        %1121 = vmatpush1.bf16.msra.mxu0 0
        %1122 = vmatprep.subr.bf16.mxu0 0
        %1123 = vmatpush1.bf16.msra.mxu0 0
        %1124 = vmatprep.subr.bf16.mxu0 0
        %1125 = vmatpush1.bf16.msra.mxu0 0
        %1126 = vmatprep.subr.bf16.mxu0 0
        %1127 = vmatpush1.bf16.msra.mxu0 0
        %1128 = vmatprep.subr.bf16.mxu0 0
        %1129 = vmatpush1.bf16.msra.mxu0 0
        %1130 = vmatprep.subr.bf16.mxu0 0
        %1131 = vmatpush1.bf16.msra.mxu0 0
        %1132 = vmatprep.subr.bf16.mxu0 0
        %1133 = vmatpush1.bf16.msra.mxu0 0
        %1134 = vmatprep.subr.bf16.mxu0 0
        %1135 = vmatpush1.bf16.msra.mxu0 0
        %1136 = vmatprep.subr.bf16.mxu0 0
        %1137 = vmatpush1.bf16.msra.mxu0 0
        %1138 = vmatprep.subr.bf16.mxu0 0
        %1139 = vmatpush1.bf16.msra.mxu0 0
        %1140 = vmatprep.subr.bf16.mxu0 0
        %1141 = vmatpush1.bf16.msra.mxu0 0
        %1142 = vmatprep.subr.bf16.mxu0 0
        %1143 = vmatpush1.bf16.msra.mxu0 0
        %1144 = vmatprep.mubr.bf16.mxu0 0
        %1145 = vmatmul.mubr.bf16.gmra.mrb[0].mxu0 %v1107
        %v1146 = vpop.f32.mrb[0].mxu0
        %v1147 = vadd.f32 0.0, %v1146
        %v1148 = vpop.f32.mrb[0].mxu0
        %v1149 = vpop.f32.mrb[0].mxu0
        %v1150 = vpop.f32.mrb[0].mxu0
        %1151 = vdwg.mxu0
        %v1152 = vadd.f32 %v1103, %v1147
        %s1153 = scalar_lea.vmem %s299, %s531 [#allocation5]
        %v1154 = vld [vmem:[%s1153] sm:$0xff]
        %v1155 = vadd.f32 %v1154, %v1152
        %v1156 = vld [vmem:[%s6] sm:$0x1]
        %v1158 = vlaneseq
        %v1159 = vshrl.u32 %v1158, 7
        %v1160 = vsub.s32 0, %v1159
        %v1161 = vrot.slane %v1156, %v1160
        %v1163 = vadd.f32 %v1155, %v1161
        %vm1164 = vcmask 261120
        %1165 = vst.msk [vmem:[%s337] sm:$0xff] %vm1164, %v1163
        %s1166 = sand.u32 %s199, 1
        %s1167 = scalar_lea.sflag [#allocation7], %s1166
        %s1168 = sand.u32 %s199, 1
        %s1169 = smul.addr %s1168, 8
        %s1170 = scalar_lea.vmem [#allocation11], %s1169
        // Predicated region
        $region65: #{tpu_custom_call.1} parent=47 // pred_check
          %p1171 = pneg %p209
        $region66: #{tpu_custom_call.1} parent=47 // pred_check_branch
          %1173 = sbr.rel (%p1171) target = $region68
        $region67: #{tpu_custom_call.1} parent=47 // pred_region
          %s1175 = ssub.s32 128, 128
          %1176 = vsyncadd %s1167, %s1175
          %s1177 = smul.addr %s29, 2
          %s1178 = sadd.s32 %s30, %s1177
          %s1179 = smul.addr %s1178, 128
          %s1180 = scalar_lea.hbm %s7, %s1179
          %s1182 = sshll.u32 %s1170, 4
          %s1183 = int_to_ptr.vmem [resolvable:$true] %s1182
          %1185 = dma.vmem_to_hbm [thread:$0]  %s1183, 128, %s1180, %s1167
        $region68: #{tpu_custom_call.1} parent=47 // pred_fallthru
          _
      $region48: #{tpu_custom_call.1} parent=5 // pred_fallthru
        _
      %p1186 = scmp.le.s32.totalorder 2, %s20
      // Predicated region
      $region69: #{tpu_custom_call.1} parent=5 // pred_check
        %p1187 = pneg %p1186
      $region70: #{tpu_custom_call.1} parent=5 // pred_check_branch
        %1189 = sbr.rel (%p1187) target = $region72
      $region71: #{tpu_custom_call.1} parent=5 // pred_region
        %s1190 = ssub.s32 %s20, 2
        // Predicated region
        $region73: #{tpu_custom_call.1} parent=71 // pred_check
          %p1191 = pneg %p215
        $region74: #{tpu_custom_call.1} parent=71 // pred_check_branch
          %1193 = sbr.rel (%p1191) target = $region76
        $region75: #{tpu_custom_call.1} parent=71 // pred_region
          %s1194 = sand.u32 %s200, 1
          %s1195 = scalar_lea.sflag [#allocation7], %s1194
          %s1196 = sand.u32 %s200, 1
          %s1197 = smul.addr %s1196, 8
          %s1198 = scalar_lea.vmem [#allocation11], %s1197
          %1199 = dma.done %s1195, 128
        $region76: #{tpu_custom_call.1} parent=71 // pred_fallthru
          _
      $region72: #{tpu_custom_call.1} parent=5 // pred_fallthru
        _
    $region6: #{tpu_custom_call.1} parent=1 // loop_footer
      %s24 = sadd.s32 1, %s20
    $region7: #{tpu_custom_call.1} parent=1 // loop_footer_branch
      %19 = sbr.rel target = $region3
    $region8: #{tpu_custom_call.1} parent=1 // loop_exit
      _
    %1200 = vsyncpa [#allocation6], 1
    %s1201 = scalar_lea.sflag [#allocation6], 1
    %1202 = vsyncpa %s1201, 1
    %1203 = vsyncpa [#allocation9], 1
    %1204 = vsyncpa [#allocation7], 1
    %s1205 = scalar_lea.sflag [#allocation7], 1
    %1206 = vsyncpa %s1205, 1

</llo_original>
